<compile_context>
chip_gen: v7x
topology: tpu7x:2x2x1
jax: 0.10.0
libtpu: 0.0.40
codegen_flags: <defaults>
</compile_context>

<pallas_src>
from dataclasses import dataclass
from typing import Optional

import jax
import jax.numpy as jnp
from jax.experimental import pallas as pl
from jax.experimental.pallas import tpu as pltpu

LANE = 128
SUBLANE = 8
BN_EPS = 1e-5
VMEM_BUDGET_BYTES = 48 << 20   # safe on v7x (64 MiB physical), plenty of slack on v5e/v6e
MAX_TILE_B = 2048


@dataclass
class ModelOutputs:
    raw_outputs: jnp.ndarray
    embeddings: Optional[jnp.ndarray] = None
    predictions: Optional[jnp.ndarray] = None


def _round_up(n, m):
    return ((n + m - 1) // m) * m


def _round_down(n, m):
    return (n // m) * m


def _pad2d(a, rows, cols):
    pr, pc = rows - a.shape[0], cols - a.shape[1]
    if pr == 0 and pc == 0:
        return a
    return jnp.pad(a, ((0, pr), (0, pc)))


# --------------------------------------------------------------------------
# Kernel: raw = x@wb + bb ; h = relu(x@w_fused + b_fused) ; pred = h@w2 + b2
# (eval-BatchNorm and the backbone Linear are folded into w_fused/b_fused
#  in the wrapper, in f32.)
# --------------------------------------------------------------------------
def _foundation_kernel(x_ref, wb_ref, bb_ref, wf_ref, bf_ref, w2_ref, b2_ref,
                       raw_ref, pred_ref):
    x = x_ref[...]

    # backbone Linear (kept only to produce raw_outputs / embeddings)
    raw = jnp.dot(x, wb_ref[...], preferred_element_type=jnp.float32) + bb_ref[...]
    raw_ref[...] = raw.astype(raw_ref.dtype)

    # pred_head Linear 1 with backbone + eval-BatchNorm folded in; independent
    # of `raw`, so the two MXU matmuls above/below can overlap.
    h = jnp.dot(x, wf_ref[...], preferred_element_type=jnp.float32) + bf_ref[...]
    h = jnp.maximum(h, 0.0)

    # TODO(synk): nn.Dropout(0.5) is identity in eval mode; training-mode
    #             stochastic masking (pltpu.prng_*) intentionally not emitted.

    # pred_head Linear 2
    pred = jnp.dot(h.astype(w2_ref.dtype), w2_ref[...],
                   preferred_element_type=jnp.float32) + b2_ref[...]
    pred_ref[...] = pred.astype(pred_ref.dtype)


# --------------------------------------------------------------------------
# Wrapper-side parameter preparation: BN fold + backbone fold + lane padding
# --------------------------------------------------------------------------
def prepare_params(params, compute_dtype=jnp.bfloat16):
    wb, bb = params["wb"], params["bb"]
    w1, b1 = params["w1"], params["b1"]
    w2, b2 = params["w2"], params["b2"]

    d_in, d_model = wb.shape
    hidden = w1.shape[1]
    d_out = w2.shape[1]

    # Fold eval-mode BatchNorm1d into Linear 1 (identical numerics, done in f32).
    scale = params["bn_g"] * jax.lax.rsqrt(params["bn_v"] + BN_EPS)     # (1, hidden)
    w1f = w1 * scale
    b1f = (b1 - params["bn_m"]) * scale + params["bn_b"]

    # Fold the backbone Linear into Linear 1 (no nonlinearity in between), f32:
    #   h = x @ (wb @ w1f) + (bb @ w1f + b1f)
    wf = wb @ w1f                                                        # (d_in, hidden)
    bf = bb @ w1f + b1f                                                  # (1, hidden)

    # Pad every feature axis (incl. d_in) to 128-lane multiples: zero padding
    # is exact after slicing and makes every load/store lane-dense.
    d_in_p = _round_up(d_in, LANE)
    d_model_p = _round_up(d_model, LANE)
    hidden_p = _round_up(hidden, LANE)
    d_out_p = _round_up(d_out, LANE)

    return {
        "wb": _pad2d(wb, d_in_p, d_model_p).astype(compute_dtype),
        "bb": _pad2d(bb, 1, d_model_p).astype(jnp.float32),
        "wf": _pad2d(wf, d_in_p, hidden_p).astype(compute_dtype),
        "bf": _pad2d(bf, 1, hidden_p).astype(jnp.float32),
        "w2": _pad2d(w2, hidden_p, d_out_p).astype(compute_dtype),
        "b2": _pad2d(b2, 1, d_out_p).astype(jnp.float32),
        "d_in": d_in,
        "d_model": d_model,
        "d_out": d_out,
    }


# --------------------------------------------------------------------------
# Forward pass
# --------------------------------------------------------------------------
_WEIGHT_KEYS = ("wb", "bb", "wf", "bf", "w2", "b2")
_WEIGHT_BUFFER_MODE = {"resolved": False, "single": True}


def foundation_model_forward(x, fused, *, tile_b=None, out_dtype=jnp.float32):
    """x: [B, d_in]. `fused` from prepare_params. Returns ModelOutputs."""
    B, d_in = x.shape
    assert d_in == fused["d_in"]
    d_model, d_out = fused["d_model"], fused["d_out"]
    d_in_p, d_model_p = fused["wb"].shape
    hidden_p = fused["wf"].shape[1]
    d_out_p = fused["w2"].shape[1]
    compute_dtype = fused["wb"].dtype

    in_item = jnp.dtype(compute_dtype).itemsize
    out_item = jnp.dtype(out_dtype).itemsize

    # --- VMEM accounting ----------------------------------------------------
    # Resident weights/biases (single-buffered when supported, counted once).
    wbytes = sum(int(fused[k].size) * jnp.dtype(fused[k].dtype).itemsize
                 for k in _WEIGHT_KEYS)
    # Per-batch-row footprint: double-buffered streams (x in, raw/pred out) plus
    # the f32 intermediates (raw pre-cast, h, pred pre-cast) held live once.
    per_row = (2 * (d_in_p * in_item + d_model_p * out_item + d_out_p * out_item)
               + 4 * (d_model_p + hidden_p + d_out_p))
    # TODO(synk): for very large d_in/hidden where a single weight outgrows the
    #             VMEM budget, add a K-reduction grid axis with an f32 VMEM
    #             accumulator ("arbitrary", last) instead of resident weights.

    # --- batch tiling ---------------------------------------------------------
    sub = 16 if compute_dtype == jnp.bfloat16 else SUBLANE
    B_sub = _round_up(B, sub)
    if tile_b is None:
        avail = max(VMEM_BUDGET_BYTES - wbytes - (4 << 20), 1 << 20)
        tile_b = int(avail // max(per_row, 1))
    tile_b = max(sub, min(_round_down(tile_b, sub), MAX_TILE_B, B_sub))
    # v7x megacore: keep >= 2 steps on the parallel batch axis when possible.
    if tile_b >= B_sub and B_sub >= 2 * sub:
        tile_b = _round_up(B_sub // 2, sub)
    B_p = _round_up(B, tile_b)

    # Avoid extra HBM passes: only cast / pad when actually required.
    x_p = x if x.dtype == compute_dtype else x.astype(compute_dtype)
    if B_p != B or d_in_p != d_in:
        x_p = jnp.pad(x_p, ((0, B_p - B), (0, d_in_p - d_in)))

    grid = (B_p // tile_b,)
    tiled = lambda i: (i, 0)     # activations stream along the batch axis
    inv = lambda i: (0, 0)       # weights/biases resident across batch tiles

    vmem_need = wbytes + tile_b * per_row + (2 << 20)
    vmem_limit = int(min(max(vmem_need, 32 << 20), VMEM_BUDGET_BYTES))

    def run(single_buffer_weights):
        wkw = {"pipeline_mode": pl.Buffered(1)} if single_buffer_weights else {}
        in_specs = [
            pl.BlockSpec((tile_b, d_in_p), tiled),
            pl.BlockSpec((d_in_p, d_model_p), inv, **wkw),
            pl.BlockSpec((1, d_model_p), inv, **wkw),
            pl.BlockSpec((d_in_p, hidden_p), inv, **wkw),
            pl.BlockSpec((1, hidden_p), inv, **wkw),
            pl.BlockSpec((hidden_p, d_out_p), inv, **wkw),
            pl.BlockSpec((1, d_out_p), inv, **wkw),
        ]
        out_specs = [
            pl.BlockSpec((tile_b, d_model_p), tiled),
            pl.BlockSpec((tile_b, d_out_p), tiled),
        ]
        extra = 0 if single_buffer_weights else wbytes   # weights double-buffered
        return pl.pallas_call(
            _foundation_kernel,
            out_shape=(
                jax.ShapeDtypeStruct((B_p, d_model_p), out_dtype),
                jax.ShapeDtypeStruct((B_p, d_out_p), out_dtype),
            ),
            grid_spec=pl.GridSpec(grid=grid, in_specs=in_specs, out_specs=out_specs),
            compiler_params=pltpu.CompilerParams(
                dimension_semantics=("parallel",),  # v7x: shard batch tiles over 2 TCs
                vmem_limit_bytes=int(min(vmem_limit + extra, VMEM_BUDGET_BYTES)),
            ),
        )(x_p, *(fused[k] for k in _WEIGHT_KEYS))

    if _WEIGHT_BUFFER_MODE["resolved"]:
        raw_p, pred_p = run(_WEIGHT_BUFFER_MODE["single"])
    else:
        try:
            raw_p, pred_p = run(True)
            jax.block_until_ready((raw_p, pred_p))
            _WEIGHT_BUFFER_MODE.update(resolved=True, single=True)
        except Exception:
            # TODO(synk): pl.Buffered(1) not accepted on this jax build — fall
            #             back to default double-buffering of invariant weights.
            _WEIGHT_BUFFER_MODE.update(resolved=True, single=False)
            raw_p, pred_p = run(False)

    # Skip slicing passes entirely when nothing was padded.
    raw = raw_p if (B_p == B and d_model_p == d_model) else raw_p[:B, :d_model]
    pred = pred_p if (B_p == B and d_out_p == d_out) else pred_p[:B, :d_out]
    # embeddings intentionally alias raw_outputs (this backbone returns (raw, raw)).
    return ModelOutputs(raw_outputs=raw, embeddings=raw, predictions=pred)


# --------------------------------------------------------------------------
# Parameter init (PyTorch-like) + references
# --------------------------------------------------------------------------
def init_params(key, d_in, d_model, hidden, d_out):
    ks = jax.random.split(key, 10)
    scale = lambda fan_in: 1.0 / jnp.sqrt(fan_in)
    return {
        # backbone Linear
        "wb": jax.random.uniform(ks[0], (d_in, d_model), jnp.float32, -scale(d_in), scale(d_in)),
        "bb": jax.random.uniform(ks[1], (1, d_model), jnp.float32, -scale(d_in), scale(d_in)),
        # pred_head Linear 1
        "w1": jax.random.uniform(ks[2], (d_model, hidden), jnp.float32, -scale(d_model), scale(d_model)),
        "b1": jax.random.uniform(ks[3], (1, hidden), jnp.float32, -scale(d_model), scale(d_model)),
        # BatchNorm1d(hidden) — non-trivial "trained" stats to exercise the fold
        "bn_g": jax.random.uniform(ks[4], (1, hidden), jnp.float32, 0.5, 1.5),
        "bn_b": 0.1 * jax.random.normal(ks[5], (1, hidden), jnp.float32),
        "bn_m": 0.1 * jax.random.normal(ks[6], (1, hidden), jnp.float32),
        "bn_v": jax.random.uniform(ks[7], (1, hidden), jnp.float32, 0.5, 1.5),
        # pred_head Linear 2
        "w2": jax.random.uniform(ks[8], (hidden, d_out), jnp.float32, -scale(hidden), scale(hidden)),
        "b2": jax.random.uniform(ks[9], (1, d_out), jnp.float32, -scale(hidden), scale(hidden)),
    }


def _reference_forward(x, p):
    """Plain-JAX f32 reference matching the original PyTorch module (eval mode)."""
    raw = x @ p["wb"] + p["bb"]
    h = raw @ p["w1"] + p["b1"]
    h = (h - p["bn_m"]) / jnp.sqrt(p["bn_v"] + BN_EPS) * p["bn_g"] + p["bn_b"]
    h = jnp.maximum(h, 0.0)
    pred = h @ p["w2"] + p["b2"]
    return raw, pred


def _reference_forward_prepared(x, fp):
    """Reference using the prepared (folded / padded / cast) params — for the bf16 path."""
    d_in_p = fp["wb"].shape[0]
    xc = x.astype(fp["wb"].dtype)
    if d_in_p != x.shape[1]:
        xc = jnp.pad(xc, ((0, 0), (0, d_in_p - x.shape[1])))
    raw = jnp.dot(xc, fp["wb"], preferred_element_type=jnp.float32) + fp["bb"]
    h = jnp.maximum(jnp.dot(xc, fp["wf"], preferred_element_type=jnp.float32) + fp["bf"], 0.0)
    pred = jnp.dot(h.astype(fp["w2"].dtype), fp["w2"],
                   preferred_element_type=jnp.float32) + fp["b2"]
    return raw[:, :fp["d_model"]], pred[:, :fp["d_out"]]


if __name__ == "__main__":
    B, D_IN, D_MODEL, HIDDEN, D_OUT = 32, 32, 64, 96, 16

    key = jax.random.PRNGKey(0)
    k_x, k_p = jax.random.split(key)
    x = jax.random.normal(k_x, (B, D_IN), jnp.float32)
    params = init_params(k_p, D_IN, D_MODEL, HIDDEN, D_OUT)

    # ---- default bf16 MXU path (f32 accumulation / f32 epilogue) -----------
    fused_bf16 = prepare_params(params)                        # bf16 by default
    out_bf = foundation_model_forward(x, fused_bf16)           # auto tile_b -> grid (2,)
    jax.block_until_ready(out_bf.predictions)

    raw_bf_ref, pred_bf_ref = _reference_forward_prepared(x, fused_bf16)
    assert out_bf.raw_outputs.shape == (B, D_MODEL)
    assert out_bf.predictions.shape == (B, D_OUT)
    assert out_bf.embeddings is not None and out_bf.embeddings.shape == (B, D_MODEL)
    assert jnp.allclose(out_bf.raw_outputs, raw_bf_ref, atol=2e-2, rtol=2e-2)
    assert jnp.allclose(out_bf.predictions, pred_bf_ref, atol=2e-2, rtol=2e-2)

    # ---- f32 path: exact-semantics check vs the unfused reference -----------
    fused_f32 = prepare_params(params, compute_dtype=jnp.float32)
    out = foundation_model_forward(x, fused_f32, tile_b=8)      # grid (4,)
    jax.block_until_ready(out.predictions)

    raw_ref, pred_ref = _reference_forward(x, params)
    assert out.raw_outputs.shape == (B, D_MODEL)
    assert out.predictions.shape == (B, D_OUT)
    assert jnp.allclose(out.raw_outputs, raw_ref, atol=1e-4, rtol=1e-4)
    assert jnp.allclose(out.predictions, pred_ref, atol=1e-4, rtol=1e-4)

    print("KERNEL_OK")
</pallas_src>

<mosaic_0001>
module attributes {stable_mosaic.version = 11 : i64} {
  func.func @_foundation_kernel(%arg0: i32, %arg1: memref<16x128xbf16, #tpu.memory_space<vmem>>, %arg2: memref<128x128xbf16, #tpu.memory_space<vmem>>, %arg3: memref<1x128xf32, #tpu.memory_space<vmem>>, %arg4: memref<128x128xbf16, #tpu.memory_space<vmem>>, %arg5: memref<1x128xf32, #tpu.memory_space<vmem>>, %arg6: memref<128x128xbf16, #tpu.memory_space<vmem>>, %arg7: memref<1x128xf32, #tpu.memory_space<vmem>>, %arg8: memref<16x128xf32, #tpu.memory_space<vmem>>, %arg9: memref<16x128xf32, #tpu.memory_space<vmem>>) attributes {dimension_semantics = [#tpu.dimension_semantics<parallel>], iteration_bounds = array<i64: 2>, scalar_prefetch = 0 : i64, scratch_operands = 0 : i64, tpu.core_type = #tpu.core_type<tc>, window_params = [{transform_indices = @transform_0, window_bounds = array<i64: 16, 128>}, {pipeline_mode = #tpu.pipeline_mode<synchronous>, transform_indices = @transform_1, window_bounds = array<i64: 128, 128>}, {pipeline_mode = #tpu.pipeline_mode<synchronous>, transform_indices = @transform_2, window_bounds = array<i64: 1, 128>}, {pipeline_mode = #tpu.pipeline_mode<synchronous>, transform_indices = @transform_3, window_bounds = array<i64: 128, 128>}, {pipeline_mode = #tpu.pipeline_mode<synchronous>, transform_indices = @transform_4, window_bounds = array<i64: 1, 128>}, {pipeline_mode = #tpu.pipeline_mode<synchronous>, transform_indices = @transform_5, window_bounds = array<i64: 128, 128>}, {pipeline_mode = #tpu.pipeline_mode<synchronous>, transform_indices = @transform_6, window_bounds = array<i64: 1, 128>}, {transform_indices = @transform_7, window_bounds = array<i64: 16, 128>}, {transform_indices = @transform_8, window_bounds = array<i64: 16, 128>}]} {
    %c0 = arith.constant 0 : index
    %c0_0 = arith.constant 0 : index
    %0 = vector.load %arg1[%c0, %c0_0] : memref<16x128xbf16, #tpu.memory_space<vmem>>, vector<16x128xbf16>
    %c0_1 = arith.constant 0 : index
    %c0_2 = arith.constant 0 : index
    %1 = vector.load %arg2[%c0_1, %c0_2] : memref<128x128xbf16, #tpu.memory_space<vmem>>, vector<128x128xbf16>
    %cst = arith.constant dense<0.000000e+00> : vector<16x128xf32>
    %2 = tpu.matmul %0, %1, %cst {dimension_numbers = #tpu.dot_dimension_numbers<[1], [0], [0], [1], [0, 0, 1, 1], [], []>} : vector<16x128xbf16>, vector<128x128xbf16>, vector<16x128xf32> -> vector<16x128xf32>
    %c0_3 = arith.constant 0 : index
    %c0_4 = arith.constant 0 : index
    %3 = vector.load %arg3[%c0_3, %c0_4] : memref<1x128xf32, #tpu.memory_space<vmem>>, vector<1x128xf32>
    %4 = vector.broadcast %3 : vector<1x128xf32> to vector<16x128xf32>
    %5 = arith.addf %2, %4 : vector<16x128xf32>
    %c0_5 = arith.constant 0 : index
    %c0_6 = arith.constant 0 : index
    %6 = vector.load %arg8[%c0_5, %c0_6] : memref<16x128xf32, #tpu.memory_space<vmem>>, vector<16x128xf32>
    tpu.vector_store %arg8[%c0_5, %c0_6], %5 {strides = array<i32>} : memref<16x128xf32, #tpu.memory_space<vmem>>, vector<16x128xf32>,
    %c0_7 = arith.constant 0 : index
    %c0_8 = arith.constant 0 : index
    %7 = vector.load %arg4[%c0_7, %c0_8] : memref<128x128xbf16, #tpu.memory_space<vmem>>, vector<128x128xbf16>
    %cst_9 = arith.constant dense<0.000000e+00> : vector<16x128xf32>
    %8 = tpu.matmul %0, %7, %cst_9 {dimension_numbers = #tpu.dot_dimension_numbers<[1], [0], [0], [1], [0, 0, 1, 1], [], []>} : vector<16x128xbf16>, vector<128x128xbf16>, vector<16x128xf32> -> vector<16x128xf32>
    %c0_10 = arith.constant 0 : index
    %c0_11 = arith.constant 0 : index
    %9 = vector.load %arg5[%c0_10, %c0_11] : memref<1x128xf32, #tpu.memory_space<vmem>>, vector<1x128xf32>
    %10 = vector.broadcast %9 : vector<1x128xf32> to vector<16x128xf32>
    %11 = arith.addf %8, %10 : vector<16x128xf32>
    %cst_12 = arith.constant 0.000000e+00 : f32
    %12 = vector.broadcast %cst_12 : f32 to vector<16x128xf32>
    %13 = arith.maximumf %11, %12 : vector<16x128xf32>
    %14 = arith.truncf %13 : vector<16x128xf32> to vector<16x128xbf16>
    %c0_13 = arith.constant 0 : index
    %c0_14 = arith.constant 0 : index
    %15 = vector.load %arg6[%c0_13, %c0_14] : memref<128x128xbf16, #tpu.memory_space<vmem>>, vector<128x128xbf16>
    %cst_15 = arith.constant dense<0.000000e+00> : vector<16x128xf32>
    %16 = tpu.matmul %14, %15, %cst_15 {dimension_numbers = #tpu.dot_dimension_numbers<[1], [0], [0], [1], [0, 0, 1, 1], [], []>} : vector<16x128xbf16>, vector<128x128xbf16>, vector<16x128xf32> -> vector<16x128xf32>
    %c0_16 = arith.constant 0 : index
    %c0_17 = arith.constant 0 : index
    %17 = vector.load %arg7[%c0_16, %c0_17] : memref<1x128xf32, #tpu.memory_space<vmem>>, vector<1x128xf32>
    %18 = vector.broadcast %17 : vector<1x128xf32> to vector<16x128xf32>
    %19 = arith.addf %16, %18 : vector<16x128xf32>
    %c0_18 = arith.constant 0 : index
    %c0_19 = arith.constant 0 : index
    %20 = vector.load %arg9[%c0_18, %c0_19] : memref<16x128xf32, #tpu.memory_space<vmem>>, vector<16x128xf32>
    tpu.vector_store %arg9[%c0_18, %c0_19], %19 {strides = array<i32>} : memref<16x128xf32, #tpu.memory_space<vmem>>, vector<16x128xf32>,
    return
  }
  func.func @transform_0(%arg0: i32) -> (i32, i32) {
    %c0_i32 = arith.constant 0 : i32
    %c0_i32_0 = arith.constant 0 : i32
    return %arg0, %c0_i32 : i32, i32
  }
  func.func @transform_1(%arg0: i32) -> (i32, i32) {
    %c0_i32 = arith.constant 0 : i32
    %c0_i32_0 = arith.constant 0 : i32
    %c0_i32_1 = arith.constant 0 : i32
    return %c0_i32, %c0_i32_0 : i32, i32
  }
  func.func @transform_2(%arg0: i32) -> (i32, i32) {
    %c0_i32 = arith.constant 0 : i32
    %c0_i32_0 = arith.constant 0 : i32
    %c0_i32_1 = arith.constant 0 : i32
    return %c0_i32, %c0_i32_0 : i32, i32
  }
  func.func @transform_3(%arg0: i32) -> (i32, i32) {
    %c0_i32 = arith.constant 0 : i32
    %c0_i32_0 = arith.constant 0 : i32
    %c0_i32_1 = arith.constant 0 : i32
    return %c0_i32, %c0_i32_0 : i32, i32
  }
  func.func @transform_4(%arg0: i32) -> (i32, i32) {
    %c0_i32 = arith.constant 0 : i32
    %c0_i32_0 = arith.constant 0 : i32
    %c0_i32_1 = arith.constant 0 : i32
    return %c0_i32, %c0_i32_0 : i32, i32
  }
  func.func @transform_5(%arg0: i32) -> (i32, i32) {
    %c0_i32 = arith.constant 0 : i32
    %c0_i32_0 = arith.constant 0 : i32
    %c0_i32_1 = arith.constant 0 : i32
    return %c0_i32, %c0_i32_0 : i32, i32
  }
  func.func @transform_6(%arg0: i32) -> (i32, i32) {
    %c0_i32 = arith.constant 0 : i32
    %c0_i32_0 = arith.constant 0 : i32
    %c0_i32_1 = arith.constant 0 : i32
    return %c0_i32, %c0_i32_0 : i32, i32
  }
  func.func @transform_7(%arg0: i32) -> (i32, i32) {
    %c0_i32 = arith.constant 0 : i32
    %c0_i32_0 = arith.constant 0 : i32
    return %arg0, %c0_i32 : i32, i32
  }
  func.func @transform_8(%arg0: i32) -> (i32, i32) {
    %c0_i32 = arith.constant 0 : i32
    %c0_i32_0 = arith.constant 0 : i32
    return %arg0, %c0_i32 : i32, i32
  }
}

module attributes {stable_mosaic.version = 11 : i64} {
  func.func @_foundation_kernel(%arg0: i32, %arg1: memref<16x128xbf16, #tpu.memory_space<vmem>>, %arg2: memref<128x128xbf16, #tpu.memory_space<vmem>>, %arg3: memref<1x128xf32, #tpu.memory_space<vmem>>, %arg4: memref<128x128xbf16, #tpu.memory_space<vmem>>, %arg5: memref<1x128xf32, #tpu.memory_space<vmem>>, %arg6: memref<128x128xbf16, #tpu.memory_space<vmem>>, %arg7: memref<1x128xf32, #tpu.memory_space<vmem>>, %arg8: memref<16x128xf32, #tpu.memory_space<vmem>>, %arg9: memref<16x128xf32, #tpu.memory_space<vmem>>) attributes {dimension_semantics = [#tpu.dimension_semantics<parallel>], iteration_bounds = array<i64: 2>, scalar_prefetch = 0 : i64, scratch_operands = 0 : i64, tpu.core_type = #tpu.core_type<tc>, window_params = [{transform_indices = @transform_0, window_bounds = array<i64: 16, 128>}, {pipeline_mode = #tpu.pipeline_mode<synchronous>, transform_indices = @transform_1, window_bounds = array<i64: 128, 128>}, {pipeline_mode = #tpu.pipeline_mode<synchronous>, transform_indices = @transform_2, window_bounds = array<i64: 1, 128>}, {pipeline_mode = #tpu.pipeline_mode<synchronous>, transform_indices = @transform_3, window_bounds = array<i64: 128, 128>}, {pipeline_mode = #tpu.pipeline_mode<synchronous>, transform_indices = @transform_4, window_bounds = array<i64: 1, 128>}, {pipeline_mode = #tpu.pipeline_mode<synchronous>, transform_indices = @transform_5, window_bounds = array<i64: 128, 128>}, {pipeline_mode = #tpu.pipeline_mode<synchronous>, transform_indices = @transform_6, window_bounds = array<i64: 1, 128>}, {transform_indices = @transform_7, window_bounds = array<i64: 16, 128>}, {transform_indices = @transform_8, window_bounds = array<i64: 16, 128>}]} {
    %c0 = arith.constant 0 : index
    %c0_0 = arith.constant 0 : index
    %0 = vector.load %arg1[%c0, %c0_0] : memref<16x128xbf16, #tpu.memory_space<vmem>>, vector<16x128xbf16>
    %c0_1 = arith.constant 0 : index
    %c0_2 = arith.constant 0 : index
    %1 = vector.load %arg2[%c0_1, %c0_2] : memref<128x128xbf16, #tpu.memory_space<vmem>>, vector<128x128xbf16>
    %cst = arith.constant dense<0.000000e+00> : vector<16x128xf32>
    %2 = tpu.matmul %0, %1, %cst {dimension_numbers = #tpu.dot_dimension_numbers<[1], [0], [0], [1], [0, 0, 1, 1], [], []>} : vector<16x128xbf16>, vector<128x128xbf16>, vector<16x128xf32> -> vector<16x128xf32>
    %c0_3 = arith.constant 0 : index
    %c0_4 = arith.constant 0 : index
    %3 = vector.load %arg3[%c0_3, %c0_4] : memref<1x128xf32, #tpu.memory_space<vmem>>, vector<1x128xf32>
    %4 = vector.broadcast %3 : vector<1x128xf32> to vector<16x128xf32>
    %5 = arith.addf %2, %4 : vector<16x128xf32>
    %c0_5 = arith.constant 0 : index
    %c0_6 = arith.constant 0 : index
    %6 = vector.load %arg8[%c0_5, %c0_6] : memref<16x128xf32, #tpu.memory_space<vmem>>, vector<16x128xf32>
    tpu.vector_store %arg8[%c0_5, %c0_6], %5 {strides = array<i32>} : memref<16x128xf32, #tpu.memory_space<vmem>>, vector<16x128xf32>,
    %c0_7 = arith.constant 0 : index
    %c0_8 = arith.constant 0 : index
    %7 = vector.load %arg4[%c0_7, %c0_8] : memref<128x128xbf16, #tpu.memory_space<vmem>>, vector<128x128xbf16>
    %cst_9 = arith.constant dense<0.000000e+00> : vector<16x128xf32>
    %8 = tpu.matmul %0, %7, %cst_9 {dimension_numbers = #tpu.dot_dimension_numbers<[1], [0], [0], [1], [0, 0, 1, 1], [], []>} : vector<16x128xbf16>, vector<128x128xbf16>, vector<16x128xf32> -> vector<16x128xf32>
    %c0_10 = arith.constant 0 : index
    %c0_11 = arith.constant 0 : index
    %9 = vector.load %arg5[%c0_10, %c0_11] : memref<1x128xf32, #tpu.memory_space<vmem>>, vector<1x128xf32>
    %10 = vector.broadcast %9 : vector<1x128xf32> to vector<16x128xf32>
    %11 = arith.addf %8, %10 : vector<16x128xf32>
    %cst_12 = arith.constant 0.000000e+00 : f32
    %12 = vector.broadcast %cst_12 : f32 to vector<16x128xf32>
    %13 = arith.maximumf %11, %12 : vector<16x128xf32>
    %14 = arith.truncf %13 : vector<16x128xf32> to vector<16x128xbf16>
    %c0_13 = arith.constant 0 : index
    %c0_14 = arith.constant 0 : index
    %15 = vector.load %arg6[%c0_13, %c0_14] : memref<128x128xbf16, #tpu.memory_space<vmem>>, vector<128x128xbf16>
    %cst_15 = arith.constant dense<0.000000e+00> : vector<16x128xf32>
    %16 = tpu.matmul %14, %15, %cst_15 {dimension_numbers = #tpu.dot_dimension_numbers<[1], [0], [0], [1], [0, 0, 1, 1], [], []>} : vector<16x128xbf16>, vector<128x128xbf16>, vector<16x128xf32> -> vector<16x128xf32>
    %c0_16 = arith.constant 0 : index
    %c0_17 = arith.constant 0 : index
    %17 = vector.load %arg7[%c0_16, %c0_17] : memref<1x128xf32, #tpu.memory_space<vmem>>, vector<1x128xf32>
    %18 = vector.broadcast %17 : vector<1x128xf32> to vector<16x128xf32>
    %19 = arith.addf %16, %18 : vector<16x128xf32>
    %c0_18 = arith.constant 0 : index
    %c0_19 = arith.constant 0 : index
    %20 = vector.load %arg9[%c0_18, %c0_19] : memref<16x128xf32, #tpu.memory_space<vmem>>, vector<16x128xf32>
    tpu.vector_store %arg9[%c0_18, %c0_19], %19 {strides = array<i32>} : memref<16x128xf32, #tpu.memory_space<vmem>>, vector<16x128xf32>,
    return
  }
  func.func @transform_0(%arg0: i32) -> (i32, i32) {
    %c0_i32 = arith.constant 0 : i32
    %c0_i32_0 = arith.constant 0 : i32
    return %arg0, %c0_i32 : i32, i32
  }
  func.func @transform_1(%arg0: i32) -> (i32, i32) {
    %c0_i32 = arith.constant 0 : i32
    %c0_i32_0 = arith.constant 0 : i32
    %c0_i32_1 = arith.constant 0 : i32
    return %c0_i32, %c0_i32_0 : i32, i32
  }
  func.func @transform_2(%arg0: i32) -> (i32, i32) {
    %c0_i32 = arith.constant 0 : i32
    %c0_i32_0 = arith.constant 0 : i32
    %c0_i32_1 = arith.constant 0 : i32
    return %c0_i32, %c0_i32_0 : i32, i32
  }
  func.func @transform_3(%arg0: i32) -> (i32, i32) {
    %c0_i32 = arith.constant 0 : i32
    %c0_i32_0 = arith.constant 0 : i32
    %c0_i32_1 = arith.constant 0 : i32
    return %c0_i32, %c0_i32_0 : i32, i32
  }
  func.func @transform_4(%arg0: i32) -> (i32, i32) {
    %c0_i32 = arith.constant 0 : i32
    %c0_i32_0 = arith.constant 0 : i32
    %c0_i32_1 = arith.constant 0 : i32
    return %c0_i32, %c0_i32_0 : i32, i32
  }
  func.func @transform_5(%arg0: i32) -> (i32, i32) {
    %c0_i32 = arith.constant 0 : i32
    %c0_i32_0 = arith.constant 0 : i32
    %c0_i32_1 = arith.constant 0 : i32
    return %c0_i32, %c0_i32_0 : i32, i32
  }
  func.func @transform_6(%arg0: i32) -> (i32, i32) {
    %c0_i32 = arith.constant 0 : i32
    %c0_i32_0 = arith.constant 0 : i32
    %c0_i32_1 = arith.constant 0 : i32
    return %c0_i32, %c0_i32_0 : i32, i32
  }
  func.func @transform_7(%arg0: i32) -> (i32, i32) {
    %c0_i32 = arith.constant 0 : i32
    %c0_i32_0 = arith.constant 0 : i32
    return %arg0, %c0_i32 : i32, i32
  }
  func.func @transform_8(%arg0: i32) -> (i32, i32) {
    %c0_i32 = arith.constant 0 : i32
    %c0_i32_0 = arith.constant 0 : i32
    return %arg0, %c0_i32 : i32, i32
  }
}

</mosaic_0001>

<llo_original>
// kernel: tpu_custom_call.1
$region0: #{tpu_custom_call.1}
  #allocation0 [shape = 'u32[]', space=smem, size = 0x4, offset = 0x4, fixed_abs, tag = 'smem constant byte address 0x4 - core index']
  #allocation1 [shape = 'u32[144,128]{1,0:T(1,128)}', space=vmem, size = 0x12000, scoped, tag = 'internal scratch']
  %s0 = inlined_call_operand.hbm [shape: bf16[32,128], index: 0, kind: input, shape index: {}]
  %s1 = inlined_call_operand.hbm [shape: bf16[128,128], index: 1, kind: input, shape index: {}]
  %s2 = inlined_call_operand.vmem [shape: f32[1,128], index: 2, kind: input, shape index: {}]
  %s3 = inlined_call_operand.hbm [shape: bf16[128,128], index: 3, kind: input, shape index: {}]
  %s4 = inlined_call_operand.vmem [shape: f32[1,128], index: 4, kind: input, shape index: {}]
  %s5 = inlined_call_operand.hbm [shape: bf16[128,128], index: 5, kind: input, shape index: {}]
  %s6 = inlined_call_operand.vmem [shape: f32[1,128], index: 6, kind: input, shape index: {}]
  %s7 = inlined_call_operand.hbm [shape: f32[32,128], index: 7, kind: output, shape index: {0}]
  %s8 = inlined_call_operand.hbm [shape: f32[32,128], index: 8, kind: output, shape index: {1}]
  %9 = xla_tuple %s7, %s8
  %s10 = sld [smem:[#allocation0]]
  $region85: #{tpu_custom_call.1} parent=0
    _
  %s12 = ssub.s32 1, %s10
  %s13 = scalar_select 0, %s12, %s10
  $region1: #{tpu_custom_call.1} parent=0
    #allocation2 [shape = 'u8[8192]{0}', space=vmem, size = 0x2000, scoped, tag = 'input window, operand 0']
    #allocation3 [shape = 's32[2]{0}', space=sflag, size = 0x8, scoped, tag = 'scoped memory for tpu_custom_call.1']
    #allocation4 [shape = 's32[2]{0}', space=sflag, size = 0x8, scoped, tag = 'scoped memory for tpu_custom_call.1']
    #allocation5 [shape = 'u8[32768]{0}', space=vmem, size = 0x8000, scoped, tag = 'input window, operand 1, single buffered']
    #allocation6 [shape = 's32[1]{0}', space=sflag, size = 0x4, scoped, tag = 'scoped memory for tpu_custom_call.1']
    #allocation7 [shape = 'u8[32768]{0}', space=vmem, size = 0x8000, scoped, tag = 'input window, operand 3, single buffered']
    #allocation8 [shape = 'u8[32768]{0}', space=vmem, size = 0x8000, scoped, tag = 'input window, operand 5, single buffered']
    #allocation9 [shape = 's32[1]{0}', space=sflag, size = 0x4, scoped, tag = 'scoped memory for tpu_custom_call.1']
    #allocation10 [shape = 'u8[16384]{0}', space=vmem, size = 0x4000, scoped, tag = 'output window, operand 0']
    #allocation11 [shape = 'u8[16384]{0}', space=vmem, size = 0x4000, scoped, tag = 'output window, operand 1']
    #allocation12 [shape = 's32[2]{0}', space=sflag, size = 0x8, scoped, tag = 'scoped memory for tpu_custom_call.1']
    %14 = vsyncpa [#allocation3], 0
    %s15 = scalar_lea.sflag [#allocation3], 1
    %16 = vsyncpa %s15, 0
    %17 = vsyncpa [#allocation6], 0
    %18 = vsyncpa [#allocation9], 0
    %19 = vsyncpa [#allocation4], 0
    %s20 = scalar_lea.sflag [#allocation4], 1
    %21 = vsyncpa %s20, 0
    %22 = vsyncpa [#allocation12], 0
    %s23 = scalar_lea.sflag [#allocation12], 1
    %24 = vsyncpa %s23, 0
    loop: start=0, step=1, limit=4
    $region2: #{tpu_custom_call.1} parent=1 // loop_pre_header
      _
    $region3: #{tpu_custom_call.1} parent=1 // loop_header
      %s26 = sphi 0, %s30
      %p27 = scmp.ge.s32.totalorder %s26, 4
      %s36 = sphi 0, %s38
      %s39 = sphi 0, %s36
      %s40 = sphi 0, %s39
      %s56 = sphi 0, %s40
      %s60 = sphi 0, %s60
      %s62 = sphi 0, %s60
      %s63 = sphi 0, %s62
      %s77 = sphi 0, %s63
      %s81 = sphi 0, %s81
      %s83 = sphi 0, %s81
      %s84 = sphi 0, %s83
      %s98 = sphi 0, %s84
      %s102 = sphi 0, %s102
      %s104 = sphi 0, %s102
      %s105 = sphi 0, %s104
      %s119 = sphi 0, %s105
      %s123 = sphi 0, %s123
      %s125 = sphi 0, %s123
      %s126 = sphi 0, %s125
      %s140 = sphi 0, %s126
      %s144 = sphi 0, %s144
      %s146 = sphi 0, %s144
      %s147 = sphi 0, %s146
      %s161 = sphi 0, %s147
      %s165 = sphi 0, %s165
      %s167 = sphi 0, %s165
      %s168 = sphi 0, %s167
      %s182 = sphi 0, %s168
      %s188 = sphi 0, %s190
      %s191 = sphi 0, %s188
      %s192 = sphi 0, %s191
      %s208 = sphi 0, %s192
      %s214 = sphi 0, %s216
      %s217 = sphi 0, %s214
      %s218 = sphi 0, %s217
      %s234 = sphi 0, %s218
    $region4: #{tpu_custom_call.1} parent=1 // loop_header_branch
      %29 = sbr.rel (%p27) target = $region8
    $region5: #{tpu_custom_call.1} parent=1 // loop_body
      %s31 = ssub.s32 %s26, 1
      %s32 = ssub.s32 %s26, 2
      %s33 = sadd.s32 %s26, 1
      %s34 = ssub.s32 %s26, %s33
      %p35 = scmp.eq.s32.totalorder %s34, 0
      %s37 = sadd.s32 %s36, 1
      %s38 = scalar_select %p35, %s36, %s37
      %p41 = pneg %p35
      %p42 = scmp.eq.s32.totalorder %s26, 1
      %p43 = por %p41, %p42
      %p44 = scmp.ne.s32.totalorder %s36, %s39
      %p45 = scmp.eq.s32.totalorder %s26, 0
      %p46 = por %p44, %p45
      %p47 = scmp.ne.s32.totalorder %s36, %s39
      %p48 = scmp.eq.s32.totalorder %s31, 1
      %p49 = por %p47, %p48
      %p50 = scmp.ne.s32.totalorder %s39, %s40
      %p51 = scmp.eq.s32.totalorder %s31, 0
      %p52 = por %p50, %p51
      %p53 = scmp.ne.s32.totalorder %s39, %s40
      %p54 = scmp.eq.s32.totalorder %s32, 1
      %p55 = por %p53, %p54
      %p57 = scmp.ne.s32.totalorder %s40, %s56
      %p58 = scmp.eq.s32.totalorder %s32, 0
      %p59 = por %p57, %p58
      %s61 = sadd.s32 %s60, 1
      %p64 = scmp.eq.s32.totalorder %s26, 1
      %p65 = scmp.ne.s32.totalorder %s60, %s62
      %p66 = scmp.eq.s32.totalorder %s26, 0
      %p67 = por %p65, %p66
      %p68 = scmp.ne.s32.totalorder %s60, %s62
      %p69 = scmp.eq.s32.totalorder %s31, 1
      %p70 = por %p68, %p69
      %p71 = scmp.ne.s32.totalorder %s62, %s63
      %p72 = scmp.eq.s32.totalorder %s31, 0
      %p73 = por %p71, %p72
      %p74 = scmp.ne.s32.totalorder %s62, %s63
      %p75 = scmp.eq.s32.totalorder %s32, 1
      %p76 = por %p74, %p75
      %p78 = scmp.ne.s32.totalorder %s63, %s77
      %p79 = scmp.eq.s32.totalorder %s32, 0
      %p80 = por %p78, %p79
      %s82 = sadd.s32 %s81, 1
      %p85 = scmp.eq.s32.totalorder %s26, 1
      %p86 = scmp.ne.s32.totalorder %s81, %s83
      %p87 = scmp.eq.s32.totalorder %s26, 0
      %p88 = por %p86, %p87
      %p89 = scmp.ne.s32.totalorder %s81, %s83
      %p90 = scmp.eq.s32.totalorder %s31, 1
      %p91 = por %p89, %p90
      %p92 = scmp.ne.s32.totalorder %s83, %s84
      %p93 = scmp.eq.s32.totalorder %s31, 0
      %p94 = por %p92, %p93
      %p95 = scmp.ne.s32.totalorder %s83, %s84
      %p96 = scmp.eq.s32.totalorder %s32, 1
      %p97 = por %p95, %p96
      %p99 = scmp.ne.s32.totalorder %s84, %s98
      %p100 = scmp.eq.s32.totalorder %s32, 0
      %p101 = por %p99, %p100
      %s103 = sadd.s32 %s102, 1
      %p106 = scmp.eq.s32.totalorder %s26, 1
      %p107 = scmp.ne.s32.totalorder %s102, %s104
      %p108 = scmp.eq.s32.totalorder %s26, 0
      %p109 = por %p107, %p108
      %p110 = scmp.ne.s32.totalorder %s102, %s104
      %p111 = scmp.eq.s32.totalorder %s31, 1
      %p112 = por %p110, %p111
      %p113 = scmp.ne.s32.totalorder %s104, %s105
      %p114 = scmp.eq.s32.totalorder %s31, 0
      %p115 = por %p113, %p114
      %p116 = scmp.ne.s32.totalorder %s104, %s105
      %p117 = scmp.eq.s32.totalorder %s32, 1
      %p118 = por %p116, %p117
      %p120 = scmp.ne.s32.totalorder %s105, %s119
      %p121 = scmp.eq.s32.totalorder %s32, 0
      %p122 = por %p120, %p121
      %s124 = sadd.s32 %s123, 1
      %p127 = scmp.eq.s32.totalorder %s26, 1
      %p128 = scmp.ne.s32.totalorder %s123, %s125
      %p129 = scmp.eq.s32.totalorder %s26, 0
      %p130 = por %p128, %p129
      %p131 = scmp.ne.s32.totalorder %s123, %s125
      %p132 = scmp.eq.s32.totalorder %s31, 1
      %p133 = por %p131, %p132
      %p134 = scmp.ne.s32.totalorder %s125, %s126
      %p135 = scmp.eq.s32.totalorder %s31, 0
      %p136 = por %p134, %p135
      %p137 = scmp.ne.s32.totalorder %s125, %s126
      %p138 = scmp.eq.s32.totalorder %s32, 1
      %p139 = por %p137, %p138
      %p141 = scmp.ne.s32.totalorder %s126, %s140
      %p142 = scmp.eq.s32.totalorder %s32, 0
      %p143 = por %p141, %p142
      %s145 = sadd.s32 %s144, 1
      %p148 = scmp.eq.s32.totalorder %s26, 1
      %p149 = scmp.ne.s32.totalorder %s144, %s146
      %p150 = scmp.eq.s32.totalorder %s26, 0
      %p151 = por %p149, %p150
      %p152 = scmp.ne.s32.totalorder %s144, %s146
      %p153 = scmp.eq.s32.totalorder %s31, 1
      %p154 = por %p152, %p153
      %p155 = scmp.ne.s32.totalorder %s146, %s147
      %p156 = scmp.eq.s32.totalorder %s31, 0
      %p157 = por %p155, %p156
      %p158 = scmp.ne.s32.totalorder %s146, %s147
      %p159 = scmp.eq.s32.totalorder %s32, 1
      %p160 = por %p158, %p159
      %p162 = scmp.ne.s32.totalorder %s147, %s161
      %p163 = scmp.eq.s32.totalorder %s32, 0
      %p164 = por %p162, %p163
      %s166 = sadd.s32 %s165, 1
      %p169 = scmp.eq.s32.totalorder %s26, 1
      %p170 = scmp.ne.s32.totalorder %s165, %s167
      %p171 = scmp.eq.s32.totalorder %s26, 0
      %p172 = por %p170, %p171
      %p173 = scmp.ne.s32.totalorder %s165, %s167
      %p174 = scmp.eq.s32.totalorder %s31, 1
      %p175 = por %p173, %p174
      %p176 = scmp.ne.s32.totalorder %s167, %s168
      %p177 = scmp.eq.s32.totalorder %s31, 0
      %p178 = por %p176, %p177
      %p179 = scmp.ne.s32.totalorder %s167, %s168
      %p180 = scmp.eq.s32.totalorder %s32, 1
      %p181 = por %p179, %p180
      %p183 = scmp.ne.s32.totalorder %s168, %s182
      %p184 = scmp.eq.s32.totalorder %s32, 0
      %p185 = por %p183, %p184
      %s186 = ssub.s32 %s26, %s33
      %p187 = scmp.eq.s32.totalorder %s186, 0
      %s189 = sadd.s32 %s188, 1
      %s190 = scalar_select %p187, %s188, %s189
      %p193 = pneg %p187
      %p194 = scmp.eq.s32.totalorder %s26, 1
      %p195 = por %p193, %p194
      %p196 = scmp.ne.s32.totalorder %s188, %s191
      %p197 = scmp.eq.s32.totalorder %s26, 0
      %p198 = por %p196, %p197
      %p199 = scmp.ne.s32.totalorder %s188, %s191
      %p200 = scmp.eq.s32.totalorder %s31, 1
      %p201 = por %p199, %p200
      %p202 = scmp.ne.s32.totalorder %s191, %s192
      %p203 = scmp.eq.s32.totalorder %s31, 0
      %p204 = por %p202, %p203
      %p205 = scmp.ne.s32.totalorder %s191, %s192
      %p206 = scmp.eq.s32.totalorder %s32, 1
      %p207 = por %p205, %p206
      %p209 = scmp.ne.s32.totalorder %s192, %s208
      %p210 = scmp.eq.s32.totalorder %s32, 0
      %p211 = por %p209, %p210
      %s212 = ssub.s32 %s26, %s33
      %p213 = scmp.eq.s32.totalorder %s212, 0
      %s215 = sadd.s32 %s214, 1
      %s216 = scalar_select %p213, %s214, %s215
      %p219 = pneg %p213
      %p220 = scmp.eq.s32.totalorder %s26, 1
      %p221 = por %p219, %p220
      %p222 = scmp.ne.s32.totalorder %s214, %s217
      %p223 = scmp.eq.s32.totalorder %s26, 0
      %p224 = por %p222, %p223
      %p225 = scmp.ne.s32.totalorder %s214, %s217
      %p226 = scmp.eq.s32.totalorder %s31, 1
      %p227 = por %p225, %p226
      %p228 = scmp.ne.s32.totalorder %s217, %s218
      %p229 = scmp.eq.s32.totalorder %s31, 0
      %p230 = por %p228, %p229
      %p231 = scmp.ne.s32.totalorder %s217, %s218
      %p232 = scmp.eq.s32.totalorder %s32, 1
      %p233 = por %p231, %p232
      %p235 = scmp.ne.s32.totalorder %s218, %s234
      %p236 = scmp.eq.s32.totalorder %s32, 0
      %p237 = por %p235, %p236
      %p238 = scmp.le.s32.totalorder 1, %s26
      %p239 = scmp.lt.s32.totalorder %s26, 3
      %p240 = pnand %p238, %p239
      %p241 = pneg %p240
      // Predicated region
      $region9: #{tpu_custom_call.1} parent=5 // pred_check
        _
      $region10: #{tpu_custom_call.1} parent=5 // pred_check_branch
        %243 = sbr.rel (%p240) target = $region12
      $region11: #{tpu_custom_call.1} parent=5 // pred_region
        %s244 = ssub.s32 %s26, 1
        // Predicated region
        $region13: #{tpu_custom_call.1} parent=11 // pred_check
          %p245 = pneg %p73
        $region14: #{tpu_custom_call.1} parent=11 // pred_check_branch
          %247 = sbr.rel (%p245) target = $region16
        $region15: #{tpu_custom_call.1} parent=11 // pred_region
          %s249 = ssub.s32 1024, 1024
          %250 = vsyncadd [#allocation6], %s249
          %s251 = sshll.u32 [#allocation5], 4
          %s252 = int_to_ptr.vmem [resolvable:$true] %s251
          %257 = dma.hbm_to_vmem [thread:$0]  %s1, 1024, %s252, [#allocation6], 64, 64, 4
        $region16: #{tpu_custom_call.1} parent=11 // pred_fallthru
          _
        // Predicated region
        $region17: #{tpu_custom_call.1} parent=11 // pred_check
          %p258 = pneg %p94
        $region18: #{tpu_custom_call.1} parent=11 // pred_check_branch
          %260 = sbr.rel (%p258) target = $region20
        $region19: #{tpu_custom_call.1} parent=11 // pred_region
          _
        $region20: #{tpu_custom_call.1} parent=11 // pred_fallthru
          _
        // Predicated region
        $region21: #{tpu_custom_call.1} parent=11 // pred_check
          %p261 = pneg %p115
        $region22: #{tpu_custom_call.1} parent=11 // pred_check_branch
          %263 = sbr.rel (%p261) target = $region24
        $region23: #{tpu_custom_call.1} parent=11 // pred_region
          %s265 = ssub.s32 1024, 1024
          %266 = vsyncadd [#allocation6], %s265
          %s267 = sshll.u32 [#allocation7], 4
          %s268 = int_to_ptr.vmem [resolvable:$true] %s267
          %273 = dma.hbm_to_vmem [thread:$0]  %s3, 1024, %s268, [#allocation6], 64, 64, 4
        $region24: #{tpu_custom_call.1} parent=11 // pred_fallthru
          _
        // Predicated region
        $region25: #{tpu_custom_call.1} parent=11 // pred_check
          %p274 = pneg %p136
        $region26: #{tpu_custom_call.1} parent=11 // pred_check_branch
          %276 = sbr.rel (%p274) target = $region28
        $region27: #{tpu_custom_call.1} parent=11 // pred_region
          _
        $region28: #{tpu_custom_call.1} parent=11 // pred_fallthru
          _
        // Predicated region
        $region29: #{tpu_custom_call.1} parent=11 // pred_check
          %p277 = pneg %p157
        $region30: #{tpu_custom_call.1} parent=11 // pred_check_branch
          %279 = sbr.rel (%p277) target = $region32
        $region31: #{tpu_custom_call.1} parent=11 // pred_region
          %s281 = ssub.s32 1024, 1024
          %282 = vsyncadd [#allocation9], %s281
          %s283 = sshll.u32 [#allocation8], 4
          %s284 = int_to_ptr.vmem [resolvable:$true] %s283
          %289 = dma.hbm_to_vmem [thread:$0]  %s5, 1024, %s284, [#allocation9], 64, 64, 4
        $region32: #{tpu_custom_call.1} parent=11 // pred_fallthru
          _
        // Predicated region
        $region33: #{tpu_custom_call.1} parent=11 // pred_check
          %p290 = pneg %p178
        $region34: #{tpu_custom_call.1} parent=11 // pred_check_branch
          %292 = sbr.rel (%p290) target = $region36
        $region35: #{tpu_custom_call.1} parent=11 // pred_region
          _
        $region36: #{tpu_custom_call.1} parent=11 // pred_fallthru
          _
      $region12: #{tpu_custom_call.1} parent=5 // pred_fallthru
        _
      %p293 = scmp.lt.s32.totalorder %s26, 2
      // Predicated region
      $region37: #{tpu_custom_call.1} parent=5 // pred_check
        %p294 = pneg %p293
      $region38: #{tpu_custom_call.1} parent=5 // pred_check_branch
        %296 = sbr.rel (%p294) target = $region40
      $region39: #{tpu_custom_call.1} parent=5 // pred_region
        // Predicated region
        $region41: #{tpu_custom_call.1} parent=39 // pred_check
          %p297 = pneg %p46
        $region42: #{tpu_custom_call.1} parent=39 // pred_check_branch
          %299 = sbr.rel (%p297) target = $region44
        $region43: #{tpu_custom_call.1} parent=39 // pred_region
          %s300 = sand.u32 %s36, 1
          %s301 = scalar_lea.sflag [#allocation3], %s300
          %s302 = sand.u32 %s36, 1
          %s303 = smul.addr %s302, 8
          %s304 = scalar_lea.vmem [#allocation2], %s303
          %s305 = smul.u32 2, %s26
          %s307 = ssub.s32 128, 128
          %308 = vsyncadd %s301, %s307
          %s309 = smul.addr %s305, 64
          %s310 = scalar_lea.hbm %s0, %s309
          %s311 = sshll.u32 %s304, 4
          %s312 = int_to_ptr.vmem [resolvable:$true] %s311
          %317 = dma.hbm_to_vmem [thread:$0]  %s310, 128, %s312, %s301, 64, 64, 4
        $region44: #{tpu_custom_call.1} parent=39 // pred_fallthru
          _
      $region40: #{tpu_custom_call.1} parent=5 // pred_fallthru
        _
      %p318 = scmp.le.s32.totalorder 1, %s26
      %p319 = scmp.lt.s32.totalorder %s26, 3
      %p320 = pnand %p318, %p319
      %p321 = pneg %p320
      // Predicated region
      $region45: #{tpu_custom_call.1} parent=5 // pred_check
        _
      $region46: #{tpu_custom_call.1} parent=5 // pred_check_branch
        %323 = sbr.rel (%p320) target = $region48
      $region47: #{tpu_custom_call.1} parent=5 // pred_region
        %s324 = ssub.s32 %s26, 1
        %s325 = sand.u32 %s39, 1
        %s326 = scalar_lea.sflag [#allocation3], %s325
        %s327 = sand.u32 %s39, 1
        %s328 = smul.addr %s327, 8
        %s329 = scalar_lea.vmem [#allocation2], %s328
        // Predicated region
        $region49: #{tpu_custom_call.1} parent=47 // pred_check
          %p330 = pneg %p52
        $region50: #{tpu_custom_call.1} parent=47 // pred_check_branch
          %332 = sbr.rel (%p330) target = $region52
        $region51: #{tpu_custom_call.1} parent=47 // pred_region
          %333 = dma.done %s326, 128
        $region52: #{tpu_custom_call.1} parent=47 // pred_fallthru
          _
        // Predicated region
        $region53: #{tpu_custom_call.1} parent=47 // pred_check
          %p334 = pneg %p73
        $region54: #{tpu_custom_call.1} parent=47 // pred_check_branch
          %336 = sbr.rel (%p334) target = $region56
        $region55: #{tpu_custom_call.1} parent=47 // pred_region
          %337 = dma.done [#allocation6], 1024
        $region56: #{tpu_custom_call.1} parent=47 // pred_fallthru
          _
        // Predicated region
        $region57: #{tpu_custom_call.1} parent=47 // pred_check
          %p338 = pneg %p115
        $region58: #{tpu_custom_call.1} parent=47 // pred_check_branch
          %340 = sbr.rel (%p338) target = $region60
        $region59: #{tpu_custom_call.1} parent=47 // pred_region
          %341 = dma.done [#allocation6], 1024
        $region60: #{tpu_custom_call.1} parent=47 // pred_fallthru
          _
        // Predicated region
        $region61: #{tpu_custom_call.1} parent=47 // pred_check
          %p342 = pneg %p157
        $region62: #{tpu_custom_call.1} parent=47 // pred_check_branch
          %344 = sbr.rel (%p342) target = $region64
        $region63: #{tpu_custom_call.1} parent=47 // pred_region
          %345 = dma.done [#allocation9], 1024
        $region64: #{tpu_custom_call.1} parent=47 // pred_fallthru
          _
        %s346 = sand.u32 %s39, 1
        %s347 = scalar_lea.sflag [#allocation3], %s346
        %s348 = sand.u32 %s39, 1
        %s349 = smul.addr %s348, 8
        %s350 = scalar_lea.vmem [#allocation2], %s349
        %p351 = pneg %p52
        %p352 = pneg %p49
        %p353 = pneg %p73
        %p354 = pneg %p70
        %p355 = pneg %p94
        %p356 = pneg %p91
        %p357 = pneg %p115
        %p358 = pneg %p112
        %p359 = pneg %p136
        %p360 = pneg %p133
        %p361 = pneg %p157
        %p362 = pneg %p154
        %p363 = pneg %p178
        %p364 = pneg %p175
        %p365 = pneg %p204
        %p366 = pneg %p201
        %s367 = sand.u32 %s191, 1
        %s368 = scalar_lea.sflag [#allocation4], %s367
        %s369 = sand.u32 %s191, 1
        %s370 = smul.addr %s369, 16
        %s371 = scalar_lea.vmem [#allocation10], %s370
        %p372 = pneg %p230
        %p373 = pneg %p227
        %s374 = sand.u32 %s217, 1
        %s375 = scalar_lea.sflag [#allocation12], %s374
        %s376 = sand.u32 %s217, 1
        %s377 = smul.addr %s376, 16
        %s378 = scalar_lea.vmem [#allocation11], %s377
        %s379 = smul.u32 2, %s31
        %s380 = smul.u32 2, %s31
        %s381 = smul.u32 2, %s31
        %v383 = vld [vmem:[%s329] sm:$0xf]
        %v384 = vld [vmem:[%s329 + $0x4] sm:$0xf]
        %v385 = vld [vmem:[#allocation5] sm:$0xf]
        %v386 = vld [vmem:[#allocation5 + $0x4] sm:$0xf]
        %v387 = vld [vmem:[#allocation5 + $0x8] sm:$0xf]
        %v388 = vld [vmem:[#allocation5 + $0xc] sm:$0xf]
        %v389 = vld [vmem:[#allocation5 + $0x10] sm:$0xf]
        %v390 = vld [vmem:[#allocation5 + $0x14] sm:$0xf]
        %v391 = vld [vmem:[#allocation5 + $0x18] sm:$0xf]
        %v392 = vld [vmem:[#allocation5 + $0x1c] sm:$0xf]
        %v393 = vld [vmem:[#allocation5 + $0x20] sm:$0xf]
        %v394 = vld [vmem:[#allocation5 + $0x24] sm:$0xf]
        %v395 = vld [vmem:[#allocation5 + $0x28] sm:$0xf]
        %v396 = vld [vmem:[#allocation5 + $0x2c] sm:$0xf]
        %v397 = vld [vmem:[#allocation5 + $0x30] sm:$0xf]
        %v398 = vld [vmem:[#allocation5 + $0x34] sm:$0xf]
        %v399 = vld [vmem:[#allocation5 + $0x38] sm:$0xf]
        %v400 = vld [vmem:[#allocation5 + $0x3c] sm:$0xf]
        %v401 = vld [vmem:[%s2] sm:$0x1]
        %v403 = vlaneseq
        %v404 = vshrl.u32 %v403, 7
        %v405 = vsub.s32 0, %v404
        %v406 = vrot.slane %v401, %v405
        %v410 = vunpack.c.l.b16 %v383
        %v411 = vunpack.c.l.b16 %v384
        %v412 = vpack.c.b16 %v411, %v410
        %v430 = vunpack.c.l.b16 %v385
        %v431 = vunpack.c.l.b16 %v386
        %v432 = vunpack.c.l.b16 %v387
        %v433 = vunpack.c.l.b16 %v388
        %v434 = vunpack.c.l.b16 %v389
        %v435 = vunpack.c.l.b16 %v390
        %v436 = vunpack.c.l.b16 %v391
        %v437 = vunpack.c.l.b16 %v392
        %v438 = vunpack.c.l.b16 %v393
        %v439 = vunpack.c.l.b16 %v394
        %v440 = vunpack.c.l.b16 %v395
        %v441 = vunpack.c.l.b16 %v396
        %v442 = vunpack.c.l.b16 %v397
        %v443 = vunpack.c.l.b16 %v398
        %v444 = vunpack.c.l.b16 %v399
        %v445 = vunpack.c.l.b16 %v400
        %v446 = vpack.c.b16 %v431, %v430
        %v447 = vpack.c.b16 %v433, %v432
        %v448 = vpack.c.b16 %v435, %v434
        %v449 = vpack.c.b16 %v437, %v436
        %v450 = vpack.c.b16 %v439, %v438
        %v451 = vpack.c.b16 %v441, %v440
        %v452 = vpack.c.b16 %v443, %v442
        %v453 = vpack.c.b16 %v445, %v444
        %462 = vmatprep.subr.bf16.mxu0 0
        %463 = vmatpush1.bf16.msra.mxu0 %v446
        %464 = vmatprep.subr.bf16.mxu0 0
        %465 = vmatpush1.bf16.msra.mxu0 %v447
        %466 = vmatprep.subr.bf16.mxu0 0
        %467 = vmatpush1.bf16.msra.mxu0 %v448
        %468 = vmatprep.subr.bf16.mxu0 0
        %469 = vmatpush1.bf16.msra.mxu0 %v449
        %470 = vmatprep.subr.bf16.mxu0 0
        %471 = vmatpush1.bf16.msra.mxu0 %v450
        %472 = vmatprep.subr.bf16.mxu0 0
        %473 = vmatpush1.bf16.msra.mxu0 %v451
        %474 = vmatprep.subr.bf16.mxu0 0
        %475 = vmatpush1.bf16.msra.mxu0 %v452
        %476 = vmatprep.subr.bf16.mxu0 0
        %477 = vmatpush1.bf16.msra.mxu0 %v453
        %478 = vmatprep.subr.bf16.mxu0 0
        %479 = vmatpush1.bf16.msra.mxu0 0
        %480 = vmatprep.subr.bf16.mxu0 0
        %481 = vmatpush1.bf16.msra.mxu0 0
        %482 = vmatprep.subr.bf16.mxu0 0
        %483 = vmatpush1.bf16.msra.mxu0 0
        %484 = vmatprep.subr.bf16.mxu0 0
        %485 = vmatpush1.bf16.msra.mxu0 0
        %486 = vmatprep.subr.bf16.mxu0 0
        %487 = vmatpush1.bf16.msra.mxu0 0
        %488 = vmatprep.subr.bf16.mxu0 0
        %489 = vmatpush1.bf16.msra.mxu0 0
        %490 = vmatprep.subr.bf16.mxu0 0
        %491 = vmatpush1.bf16.msra.mxu0 0
        %492 = vmatprep.subr.bf16.mxu0 0
        %493 = vmatpush1.bf16.msra.mxu0 0
        %494 = vmatprep.mubr.bf16.mxu0 0
        %495 = vmatmul.mubr.bf16.gmra.mrb[0].mxu0 %v412
        %v496 = vpop.f32.mrb[0].mxu0
        %v497 = vadd.f32 %v406, %v496
        %v498 = vpop.f32.mrb[0].mxu0
        %v499 = vpop.f32.mrb[0].mxu0
        %v500 = vadd.f32 %v406, %v499
        %v501 = vpop.f32.mrb[0].mxu0
        %502 = vdwg.mxu0
        %503 = vst [vmem:[%s371] sm:$0xff] %v497
        %504 = vst [vmem:[%s371 + $0x8] sm:$0xff] %v500
        %v505 = vld [vmem:[#allocation7] sm:$0xf]
        %v506 = vld [vmem:[#allocation7 + $0x4] sm:$0xf]
        %v507 = vld [vmem:[#allocation7 + $0x8] sm:$0xf]
        %v508 = vld [vmem:[#allocation7 + $0xc] sm:$0xf]
        %v509 = vld [vmem:[#allocation7 + $0x10] sm:$0xf]
        %v510 = vld [vmem:[#allocation7 + $0x14] sm:$0xf]
        %v511 = vld [vmem:[#allocation7 + $0x18] sm:$0xf]
        %v512 = vld [vmem:[#allocation7 + $0x1c] sm:$0xf]
        %v513 = vld [vmem:[#allocation7 + $0x20] sm:$0xf]
        %v514 = vld [vmem:[#allocation7 + $0x24] sm:$0xf]
        %v515 = vld [vmem:[#allocation7 + $0x28] sm:$0xf]
        %v516 = vld [vmem:[#allocation7 + $0x2c] sm:$0xf]
        %v517 = vld [vmem:[#allocation7 + $0x30] sm:$0xf]
        %v518 = vld [vmem:[#allocation7 + $0x34] sm:$0xf]
        %v519 = vld [vmem:[#allocation7 + $0x38] sm:$0xf]
        %v520 = vld [vmem:[#allocation7 + $0x3c] sm:$0xf]
        %v521 = vld [vmem:[%s4] sm:$0x1]
        %v523 = vlaneseq
        %v524 = vshrl.u32 %v523, 7
        %v525 = vsub.s32 0, %v524
        %v526 = vrot.slane %v521, %v525
        %v544 = vunpack.c.l.b16 %v505
        %v545 = vunpack.c.l.b16 %v506
        %v546 = vunpack.c.l.b16 %v507
        %v547 = vunpack.c.l.b16 %v508
        %v548 = vunpack.c.l.b16 %v509
        %v549 = vunpack.c.l.b16 %v510
        %v550 = vunpack.c.l.b16 %v511
        %v551 = vunpack.c.l.b16 %v512
        %v552 = vunpack.c.l.b16 %v513
        %v553 = vunpack.c.l.b16 %v514
        %v554 = vunpack.c.l.b16 %v515
        %v555 = vunpack.c.l.b16 %v516
        %v556 = vunpack.c.l.b16 %v517
        %v557 = vunpack.c.l.b16 %v518
        %v558 = vunpack.c.l.b16 %v519
        %v559 = vunpack.c.l.b16 %v520
        %v560 = vpack.c.b16 %v545, %v544
        %v561 = vpack.c.b16 %v547, %v546
        %v562 = vpack.c.b16 %v549, %v548
        %v563 = vpack.c.b16 %v551, %v550
        %v564 = vpack.c.b16 %v553, %v552
        %v565 = vpack.c.b16 %v555, %v554
        %v566 = vpack.c.b16 %v557, %v556
        %v567 = vpack.c.b16 %v559, %v558
        %576 = vmatprep.subr.bf16.mxu0 0
        %577 = vmatpush1.bf16.msra.mxu0 %v560
        %578 = vmatprep.subr.bf16.mxu0 0
        %579 = vmatpush1.bf16.msra.mxu0 %v561
        %580 = vmatprep.subr.bf16.mxu0 0
        %581 = vmatpush1.bf16.msra.mxu0 %v562
        %582 = vmatprep.subr.bf16.mxu0 0
        %583 = vmatpush1.bf16.msra.mxu0 %v563
        %584 = vmatprep.subr.bf16.mxu0 0
        %585 = vmatpush1.bf16.msra.mxu0 %v564
        %586 = vmatprep.subr.bf16.mxu0 0
        %587 = vmatpush1.bf16.msra.mxu0 %v565
        %588 = vmatprep.subr.bf16.mxu0 0
        %589 = vmatpush1.bf16.msra.mxu0 %v566
        %590 = vmatprep.subr.bf16.mxu0 0
        %591 = vmatpush1.bf16.msra.mxu0 %v567
        %592 = vmatprep.subr.bf16.mxu0 0
        %593 = vmatpush1.bf16.msra.mxu0 0
        %594 = vmatprep.subr.bf16.mxu0 0
        %595 = vmatpush1.bf16.msra.mxu0 0
        %596 = vmatprep.subr.bf16.mxu0 0
        %597 = vmatpush1.bf16.msra.mxu0 0
        %598 = vmatprep.subr.bf16.mxu0 0
        %599 = vmatpush1.bf16.msra.mxu0 0
        %600 = vmatprep.subr.bf16.mxu0 0
        %601 = vmatpush1.bf16.msra.mxu0 0
        %602 = vmatprep.subr.bf16.mxu0 0
        %603 = vmatpush1.bf16.msra.mxu0 0
        %604 = vmatprep.subr.bf16.mxu0 0
        %605 = vmatpush1.bf16.msra.mxu0 0
        %606 = vmatprep.subr.bf16.mxu0 0
        %607 = vmatpush1.bf16.msra.mxu0 0
        %608 = vmatprep.mubr.bf16.mxu0 0
        %609 = vmatmul.mubr.bf16.gmra.mrb[0].mxu0 %v412
        %v610 = vpop.f32.mrb[0].mxu0
        %v611 = vadd.f32 %v526, %v610
        %v612 = vpop.f32.mrb[0].mxu0
        %v613 = vpop.f32.mrb[0].mxu0
        %v614 = vadd.f32 %v526, %v613
        %v615 = vpop.f32.mrb[0].mxu0
        %616 = vdwg.mxu0
        %v617 = vmax.f32 %v611, 0.0
        %v618 = vmax.f32 %v614, 0.0
        %v619 = vpack.c.bf16 %v618, %v617
        %v620 = vld [vmem:[#allocation8] sm:$0xf]
        %v621 = vld [vmem:[#allocation8 + $0x4] sm:$0xf]
        %v622 = vld [vmem:[#allocation8 + $0x8] sm:$0xf]
        %v623 = vld [vmem:[#allocation8 + $0xc] sm:$0xf]
        %v624 = vld [vmem:[#allocation8 + $0x10] sm:$0xf]
        %v625 = vld [vmem:[#allocation8 + $0x14] sm:$0xf]
        %v626 = vld [vmem:[#allocation8 + $0x18] sm:$0xf]
        %v627 = vld [vmem:[#allocation8 + $0x1c] sm:$0xf]
        %v628 = vld [vmem:[#allocation8 + $0x20] sm:$0xf]
        %v629 = vld [vmem:[#allocation8 + $0x24] sm:$0xf]
        %v630 = vld [vmem:[#allocation8 + $0x28] sm:$0xf]
        %v631 = vld [vmem:[#allocation8 + $0x2c] sm:$0xf]
        %v632 = vld [vmem:[#allocation8 + $0x30] sm:$0xf]
        %v633 = vld [vmem:[#allocation8 + $0x34] sm:$0xf]
        %v634 = vld [vmem:[#allocation8 + $0x38] sm:$0xf]
        %v635 = vld [vmem:[#allocation8 + $0x3c] sm:$0xf]
        %v636 = vld [vmem:[%s6] sm:$0x1]
        %v638 = vlaneseq
        %v639 = vshrl.u32 %v638, 7
        %v640 = vsub.s32 0, %v639
        %v641 = vrot.slane %v636, %v640
        %v659 = vunpack.c.l.b16 %v620
        %v660 = vunpack.c.l.b16 %v621
        %v661 = vunpack.c.l.b16 %v622
        %v662 = vunpack.c.l.b16 %v623
        %v663 = vunpack.c.l.b16 %v624
        %v664 = vunpack.c.l.b16 %v625
        %v665 = vunpack.c.l.b16 %v626
        %v666 = vunpack.c.l.b16 %v627
        %v667 = vunpack.c.l.b16 %v628
        %v668 = vunpack.c.l.b16 %v629
        %v669 = vunpack.c.l.b16 %v630
        %v670 = vunpack.c.l.b16 %v631
        %v671 = vunpack.c.l.b16 %v632
        %v672 = vunpack.c.l.b16 %v633
        %v673 = vunpack.c.l.b16 %v634
        %v674 = vunpack.c.l.b16 %v635
        %v675 = vpack.c.b16 %v660, %v659
        %v676 = vpack.c.b16 %v662, %v661
        %v677 = vpack.c.b16 %v664, %v663
        %v678 = vpack.c.b16 %v666, %v665
        %v679 = vpack.c.b16 %v668, %v667
        %v680 = vpack.c.b16 %v670, %v669
        %v681 = vpack.c.b16 %v672, %v671
        %v682 = vpack.c.b16 %v674, %v673
        %691 = vmatprep.subr.bf16.mxu0 0
        %692 = vmatpush1.bf16.msra.mxu0 %v675
        %693 = vmatprep.subr.bf16.mxu0 0
        %694 = vmatpush1.bf16.msra.mxu0 %v676
        %695 = vmatprep.subr.bf16.mxu0 0
        %696 = vmatpush1.bf16.msra.mxu0 %v677
        %697 = vmatprep.subr.bf16.mxu0 0
        %698 = vmatpush1.bf16.msra.mxu0 %v678
        %699 = vmatprep.subr.bf16.mxu0 0
        %700 = vmatpush1.bf16.msra.mxu0 %v679
        %701 = vmatprep.subr.bf16.mxu0 0
        %702 = vmatpush1.bf16.msra.mxu0 %v680
        %703 = vmatprep.subr.bf16.mxu0 0
        %704 = vmatpush1.bf16.msra.mxu0 %v681
        %705 = vmatprep.subr.bf16.mxu0 0
        %706 = vmatpush1.bf16.msra.mxu0 %v682
        %707 = vmatprep.subr.bf16.mxu0 0
        %708 = vmatpush1.bf16.msra.mxu0 0
        %709 = vmatprep.subr.bf16.mxu0 0
        %710 = vmatpush1.bf16.msra.mxu0 0
        %711 = vmatprep.subr.bf16.mxu0 0
        %712 = vmatpush1.bf16.msra.mxu0 0
        %713 = vmatprep.subr.bf16.mxu0 0
        %714 = vmatpush1.bf16.msra.mxu0 0
        %715 = vmatprep.subr.bf16.mxu0 0
        %716 = vmatpush1.bf16.msra.mxu0 0
        %717 = vmatprep.subr.bf16.mxu0 0
        %718 = vmatpush1.bf16.msra.mxu0 0
        %719 = vmatprep.subr.bf16.mxu0 0
        %720 = vmatpush1.bf16.msra.mxu0 0
        %721 = vmatprep.subr.bf16.mxu0 0
        %722 = vmatpush1.bf16.msra.mxu0 0
        %723 = vmatprep.mubr.bf16.mxu0 0
        %724 = vmatmul.mubr.bf16.gmra.mrb[0].mxu0 %v619
        %v725 = vpop.f32.mrb[0].mxu0
        %v726 = vadd.f32 %v641, %v725
        %v727 = vpop.f32.mrb[0].mxu0
        %v728 = vpop.f32.mrb[0].mxu0
        %v729 = vadd.f32 %v641, %v728
        %v730 = vpop.f32.mrb[0].mxu0
        %731 = vdwg.mxu0
        %732 = vst [vmem:[%s378] sm:$0xff] %v726
        %733 = vst [vmem:[%s378 + $0x8] sm:$0xff] %v729
        %s734 = sand.u32 %s191, 1
        %s735 = scalar_lea.sflag [#allocation4], %s734
        %s736 = sand.u32 %s191, 1
        %s737 = smul.addr %s736, 16
        %s738 = scalar_lea.vmem [#allocation10], %s737
        %s739 = sand.u32 %s217, 1
        %s740 = scalar_lea.sflag [#allocation12], %s739
        %s741 = sand.u32 %s217, 1
        %s742 = smul.addr %s741, 16
        %s743 = scalar_lea.vmem [#allocation11], %s742
        // Predicated region
        $region65: #{tpu_custom_call.1} parent=47 // pred_check
          %p744 = pneg %p201
        $region66: #{tpu_custom_call.1} parent=47 // pred_check_branch
          %746 = sbr.rel (%p744) target = $region68
        $region67: #{tpu_custom_call.1} parent=47 // pred_region
          %s747 = smul.u32 2, %s31
          %s749 = ssub.s32 256, 256
          %750 = vsyncadd %s735, %s749
          %s751 = smul.addr %s747, 128
          %s752 = scalar_lea.hbm %s7, %s751
          %s753 = sshll.u32 %s738, 4
          %s754 = int_to_ptr.vmem [resolvable:$true] %s753
          %759 = dma.vmem_to_hbm [thread:$0]  %s754, 256, %s752, %s735, 128, 128, 8
        $region68: #{tpu_custom_call.1} parent=47 // pred_fallthru
          _
        // Predicated region
        $region69: #{tpu_custom_call.1} parent=47 // pred_check
          %p760 = pneg %p227
        $region70: #{tpu_custom_call.1} parent=47 // pred_check_branch
          %762 = sbr.rel (%p760) target = $region72
        $region71: #{tpu_custom_call.1} parent=47 // pred_region
          %s763 = smul.u32 2, %s31
          %s765 = ssub.s32 256, 256
          %766 = vsyncadd %s740, %s765
          %s767 = smul.addr %s763, 128
          %s768 = scalar_lea.hbm %s8, %s767
          %s769 = sshll.u32 %s743, 4
          %s770 = int_to_ptr.vmem [resolvable:$true] %s769
          %775 = dma.vmem_to_hbm [thread:$0]  %s770, 256, %s768, %s740, 128, 128, 8
        $region72: #{tpu_custom_call.1} parent=47 // pred_fallthru
          _
      $region48: #{tpu_custom_call.1} parent=5 // pred_fallthru
        _
      %p776 = scmp.le.s32.totalorder 2, %s26
      // Predicated region
      $region73: #{tpu_custom_call.1} parent=5 // pred_check
        %p777 = pneg %p776
      $region74: #{tpu_custom_call.1} parent=5 // pred_check_branch
        %779 = sbr.rel (%p777) target = $region76
      $region75: #{tpu_custom_call.1} parent=5 // pred_region
        %s780 = ssub.s32 %s26, 2
        // Predicated region
        $region77: #{tpu_custom_call.1} parent=75 // pred_check
          %p781 = pneg %p207
        $region78: #{tpu_custom_call.1} parent=75 // pred_check_branch
          %783 = sbr.rel (%p781) target = $region80
        $region79: #{tpu_custom_call.1} parent=75 // pred_region
          %s784 = sand.u32 %s192, 1
          %s785 = scalar_lea.sflag [#allocation4], %s784
          %s786 = sand.u32 %s192, 1
          %s787 = smul.addr %s786, 16
          %s788 = scalar_lea.vmem [#allocation10], %s787
          %789 = dma.done %s785, 256
        $region80: #{tpu_custom_call.1} parent=75 // pred_fallthru
          _
        // Predicated region
        $region81: #{tpu_custom_call.1} parent=75 // pred_check
          %p790 = pneg %p233
        $region82: #{tpu_custom_call.1} parent=75 // pred_check_branch
          %792 = sbr.rel (%p790) target = $region84
        $region83: #{tpu_custom_call.1} parent=75 // pred_region
          %s793 = sand.u32 %s218, 1
          %s794 = scalar_lea.sflag [#allocation12], %s793
          %s795 = sand.u32 %s218, 1
          %s796 = smul.addr %s795, 16
          %s797 = scalar_lea.vmem [#allocation11], %s796
          %798 = dma.done %s794, 256
        $region84: #{tpu_custom_call.1} parent=75 // pred_fallthru
          _
      $region76: #{tpu_custom_call.1} parent=5 // pred_fallthru
        _
    $region6: #{tpu_custom_call.1} parent=1 // loop_footer
      %s30 = sadd.s32 1, %s26
    $region7: #{tpu_custom_call.1} parent=1 // loop_footer_branch
      %25 = sbr.rel target = $region3
    $region8: #{tpu_custom_call.1} parent=1 // loop_exit
      _
    %799 = vsyncpa [#allocation3], 1
    %s800 = scalar_lea.sflag [#allocation3], 1
    %801 = vsyncpa %s800, 1
    %802 = vsyncpa [#allocation6], 1
    %803 = vsyncpa [#allocation9], 1
    %804 = vsyncpa [#allocation4], 1
    %s805 = scalar_lea.sflag [#allocation4], 1
    %806 = vsyncpa %s805, 1
    %807 = vsyncpa [#allocation12], 1
    %s808 = scalar_lea.sflag [#allocation12], 1
    %809 = vsyncpa %s808, 1

// kernel: tpu_custom_call.1
$region0: #{tpu_custom_call.1}
  #allocation0 [shape = 'u32[]', space=smem, size = 0x4, offset = 0x4, fixed_abs, tag = 'smem constant byte address 0x4 - core index']
  #allocation1 [shape = 'u32[144,128]{1,0:T(1,128)}', space=vmem, size = 0x12000, scoped, tag = 'internal scratch']
  %s0 = inlined_call_operand.hbm [shape: bf16[32,128], index: 0, kind: input, shape index: {}]
  %s1 = inlined_call_operand.hbm [shape: bf16[128,128], index: 1, kind: input, shape index: {}]
  %s2 = inlined_call_operand.vmem [shape: f32[1,128], index: 2, kind: input, shape index: {}]
  %s3 = inlined_call_operand.hbm [shape: bf16[128,128], index: 3, kind: input, shape index: {}]
  %s4 = inlined_call_operand.vmem [shape: f32[1,128], index: 4, kind: input, shape index: {}]
  %s5 = inlined_call_operand.hbm [shape: bf16[128,128], index: 5, kind: input, shape index: {}]
  %s6 = inlined_call_operand.vmem [shape: f32[1,128], index: 6, kind: input, shape index: {}]
  %s7 = inlined_call_operand.hbm [shape: f32[32,128], index: 7, kind: output, shape index: {0}]
  %s8 = inlined_call_operand.hbm [shape: f32[32,128], index: 8, kind: output, shape index: {1}]
  %9 = xla_tuple %s7, %s8
  %s10 = sld [smem:[#allocation0]]
  $region85: #{tpu_custom_call.1} parent=0
    _
  %s12 = ssub.s32 1, %s10
  %s13 = scalar_select 0, %s12, %s10
  $region1: #{tpu_custom_call.1} parent=0
    #allocation2 [shape = 'u8[8192]{0}', space=vmem, size = 0x2000, scoped, tag = 'input window, operand 0']
    #allocation3 [shape = 's32[2]{0}', space=sflag, size = 0x8, scoped, tag = 'scoped memory for tpu_custom_call.1']
    #allocation4 [shape = 's32[2]{0}', space=sflag, size = 0x8, scoped, tag = 'scoped memory for tpu_custom_call.1']
    #allocation5 [shape = 'u8[32768]{0}', space=vmem, size = 0x8000, scoped, tag = 'input window, operand 1, single buffered']
    #allocation6 [shape = 's32[1]{0}', space=sflag, size = 0x4, scoped, tag = 'scoped memory for tpu_custom_call.1']
    #allocation7 [shape = 'u8[32768]{0}', space=vmem, size = 0x8000, scoped, tag = 'input window, operand 3, single buffered']
    #allocation8 [shape = 'u8[32768]{0}', space=vmem, size = 0x8000, scoped, tag = 'input window, operand 5, single buffered']
    #allocation9 [shape = 's32[1]{0}', space=sflag, size = 0x4, scoped, tag = 'scoped memory for tpu_custom_call.1']
    #allocation10 [shape = 'u8[16384]{0}', space=vmem, size = 0x4000, scoped, tag = 'output window, operand 0']
    #allocation11 [shape = 'u8[16384]{0}', space=vmem, size = 0x4000, scoped, tag = 'output window, operand 1']
    #allocation12 [shape = 's32[2]{0}', space=sflag, size = 0x8, scoped, tag = 'scoped memory for tpu_custom_call.1']
    %14 = vsyncpa [#allocation3], 0
    %s15 = scalar_lea.sflag [#allocation3], 1
    %16 = vsyncpa %s15, 0
    %17 = vsyncpa [#allocation6], 0
    %18 = vsyncpa [#allocation9], 0
    %19 = vsyncpa [#allocation4], 0
    %s20 = scalar_lea.sflag [#allocation4], 1
    %21 = vsyncpa %s20, 0
    %22 = vsyncpa [#allocation12], 0
    %s23 = scalar_lea.sflag [#allocation12], 1
    %24 = vsyncpa %s23, 0
    loop: start=0, step=1, limit=4
    $region2: #{tpu_custom_call.1} parent=1 // loop_pre_header
      _
    $region3: #{tpu_custom_call.1} parent=1 // loop_header
      %s26 = sphi 0, %s30
      %p27 = scmp.ge.s32.totalorder %s26, 4
      %s36 = sphi 0, %s38
      %s39 = sphi 0, %s36
      %s40 = sphi 0, %s39
      %s56 = sphi 0, %s40
      %s60 = sphi 0, %s60
      %s62 = sphi 0, %s60
      %s63 = sphi 0, %s62
      %s77 = sphi 0, %s63
      %s81 = sphi 0, %s81
      %s83 = sphi 0, %s81
      %s84 = sphi 0, %s83
      %s98 = sphi 0, %s84
      %s102 = sphi 0, %s102
      %s104 = sphi 0, %s102
      %s105 = sphi 0, %s104
      %s119 = sphi 0, %s105
      %s123 = sphi 0, %s123
      %s125 = sphi 0, %s123
      %s126 = sphi 0, %s125
      %s140 = sphi 0, %s126
      %s144 = sphi 0, %s144
      %s146 = sphi 0, %s144
      %s147 = sphi 0, %s146
      %s161 = sphi 0, %s147
      %s165 = sphi 0, %s165
      %s167 = sphi 0, %s165
      %s168 = sphi 0, %s167
      %s182 = sphi 0, %s168
      %s188 = sphi 0, %s190
      %s191 = sphi 0, %s188
      %s192 = sphi 0, %s191
      %s208 = sphi 0, %s192
      %s214 = sphi 0, %s216
      %s217 = sphi 0, %s214
      %s218 = sphi 0, %s217
      %s234 = sphi 0, %s218
    $region4: #{tpu_custom_call.1} parent=1 // loop_header_branch
      %29 = sbr.rel (%p27) target = $region8
    $region5: #{tpu_custom_call.1} parent=1 // loop_body
      %s31 = ssub.s32 %s26, 1
      %s32 = ssub.s32 %s26, 2
      %s33 = sadd.s32 %s26, 1
      %s34 = ssub.s32 %s26, %s33
      %p35 = scmp.eq.s32.totalorder %s34, 0
      %s37 = sadd.s32 %s36, 1
      %s38 = scalar_select %p35, %s36, %s37
      %p41 = pneg %p35
      %p42 = scmp.eq.s32.totalorder %s26, 1
      %p43 = por %p41, %p42
      %p44 = scmp.ne.s32.totalorder %s36, %s39
      %p45 = scmp.eq.s32.totalorder %s26, 0
      %p46 = por %p44, %p45
      %p47 = scmp.ne.s32.totalorder %s36, %s39
      %p48 = scmp.eq.s32.totalorder %s31, 1
      %p49 = por %p47, %p48
      %p50 = scmp.ne.s32.totalorder %s39, %s40
      %p51 = scmp.eq.s32.totalorder %s31, 0
      %p52 = por %p50, %p51
      %p53 = scmp.ne.s32.totalorder %s39, %s40
      %p54 = scmp.eq.s32.totalorder %s32, 1
      %p55 = por %p53, %p54
      %p57 = scmp.ne.s32.totalorder %s40, %s56
      %p58 = scmp.eq.s32.totalorder %s32, 0
      %p59 = por %p57, %p58
      %s61 = sadd.s32 %s60, 1
      %p64 = scmp.eq.s32.totalorder %s26, 1
      %p65 = scmp.ne.s32.totalorder %s60, %s62
      %p66 = scmp.eq.s32.totalorder %s26, 0
      %p67 = por %p65, %p66
      %p68 = scmp.ne.s32.totalorder %s60, %s62
      %p69 = scmp.eq.s32.totalorder %s31, 1
      %p70 = por %p68, %p69
      %p71 = scmp.ne.s32.totalorder %s62, %s63
      %p72 = scmp.eq.s32.totalorder %s31, 0
      %p73 = por %p71, %p72
      %p74 = scmp.ne.s32.totalorder %s62, %s63
      %p75 = scmp.eq.s32.totalorder %s32, 1
      %p76 = por %p74, %p75
      %p78 = scmp.ne.s32.totalorder %s63, %s77
      %p79 = scmp.eq.s32.totalorder %s32, 0
      %p80 = por %p78, %p79
      %s82 = sadd.s32 %s81, 1
      %p85 = scmp.eq.s32.totalorder %s26, 1
      %p86 = scmp.ne.s32.totalorder %s81, %s83
      %p87 = scmp.eq.s32.totalorder %s26, 0
      %p88 = por %p86, %p87
      %p89 = scmp.ne.s32.totalorder %s81, %s83
      %p90 = scmp.eq.s32.totalorder %s31, 1
      %p91 = por %p89, %p90
      %p92 = scmp.ne.s32.totalorder %s83, %s84
      %p93 = scmp.eq.s32.totalorder %s31, 0
      %p94 = por %p92, %p93
      %p95 = scmp.ne.s32.totalorder %s83, %s84
      %p96 = scmp.eq.s32.totalorder %s32, 1
      %p97 = por %p95, %p96
      %p99 = scmp.ne.s32.totalorder %s84, %s98
      %p100 = scmp.eq.s32.totalorder %s32, 0
      %p101 = por %p99, %p100
      %s103 = sadd.s32 %s102, 1
      %p106 = scmp.eq.s32.totalorder %s26, 1
      %p107 = scmp.ne.s32.totalorder %s102, %s104
      %p108 = scmp.eq.s32.totalorder %s26, 0
      %p109 = por %p107, %p108
      %p110 = scmp.ne.s32.totalorder %s102, %s104
      %p111 = scmp.eq.s32.totalorder %s31, 1
      %p112 = por %p110, %p111
      %p113 = scmp.ne.s32.totalorder %s104, %s105
      %p114 = scmp.eq.s32.totalorder %s31, 0
      %p115 = por %p113, %p114
      %p116 = scmp.ne.s32.totalorder %s104, %s105
      %p117 = scmp.eq.s32.totalorder %s32, 1
      %p118 = por %p116, %p117
      %p120 = scmp.ne.s32.totalorder %s105, %s119
      %p121 = scmp.eq.s32.totalorder %s32, 0
      %p122 = por %p120, %p121
      %s124 = sadd.s32 %s123, 1
      %p127 = scmp.eq.s32.totalorder %s26, 1
      %p128 = scmp.ne.s32.totalorder %s123, %s125
      %p129 = scmp.eq.s32.totalorder %s26, 0
      %p130 = por %p128, %p129
      %p131 = scmp.ne.s32.totalorder %s123, %s125
      %p132 = scmp.eq.s32.totalorder %s31, 1
      %p133 = por %p131, %p132
      %p134 = scmp.ne.s32.totalorder %s125, %s126
      %p135 = scmp.eq.s32.totalorder %s31, 0
      %p136 = por %p134, %p135
      %p137 = scmp.ne.s32.totalorder %s125, %s126
      %p138 = scmp.eq.s32.totalorder %s32, 1
      %p139 = por %p137, %p138
      %p141 = scmp.ne.s32.totalorder %s126, %s140
      %p142 = scmp.eq.s32.totalorder %s32, 0
      %p143 = por %p141, %p142
      %s145 = sadd.s32 %s144, 1
      %p148 = scmp.eq.s32.totalorder %s26, 1
      %p149 = scmp.ne.s32.totalorder %s144, %s146
      %p150 = scmp.eq.s32.totalorder %s26, 0
      %p151 = por %p149, %p150
      %p152 = scmp.ne.s32.totalorder %s144, %s146
      %p153 = scmp.eq.s32.totalorder %s31, 1
      %p154 = por %p152, %p153
      %p155 = scmp.ne.s32.totalorder %s146, %s147
      %p156 = scmp.eq.s32.totalorder %s31, 0
      %p157 = por %p155, %p156
      %p158 = scmp.ne.s32.totalorder %s146, %s147
      %p159 = scmp.eq.s32.totalorder %s32, 1
      %p160 = por %p158, %p159
      %p162 = scmp.ne.s32.totalorder %s147, %s161
      %p163 = scmp.eq.s32.totalorder %s32, 0
      %p164 = por %p162, %p163
      %s166 = sadd.s32 %s165, 1
      %p169 = scmp.eq.s32.totalorder %s26, 1
      %p170 = scmp.ne.s32.totalorder %s165, %s167
      %p171 = scmp.eq.s32.totalorder %s26, 0
      %p172 = por %p170, %p171
      %p173 = scmp.ne.s32.totalorder %s165, %s167
      %p174 = scmp.eq.s32.totalorder %s31, 1
      %p175 = por %p173, %p174
      %p176 = scmp.ne.s32.totalorder %s167, %s168
      %p177 = scmp.eq.s32.totalorder %s31, 0
      %p178 = por %p176, %p177
      %p179 = scmp.ne.s32.totalorder %s167, %s168
      %p180 = scmp.eq.s32.totalorder %s32, 1
      %p181 = por %p179, %p180
      %p183 = scmp.ne.s32.totalorder %s168, %s182
      %p184 = scmp.eq.s32.totalorder %s32, 0
      %p185 = por %p183, %p184
      %s186 = ssub.s32 %s26, %s33
      %p187 = scmp.eq.s32.totalorder %s186, 0
      %s189 = sadd.s32 %s188, 1
      %s190 = scalar_select %p187, %s188, %s189
      %p193 = pneg %p187
      %p194 = scmp.eq.s32.totalorder %s26, 1
      %p195 = por %p193, %p194
      %p196 = scmp.ne.s32.totalorder %s188, %s191
      %p197 = scmp.eq.s32.totalorder %s26, 0
      %p198 = por %p196, %p197
      %p199 = scmp.ne.s32.totalorder %s188, %s191
      %p200 = scmp.eq.s32.totalorder %s31, 1
      %p201 = por %p199, %p200
      %p202 = scmp.ne.s32.totalorder %s191, %s192
      %p203 = scmp.eq.s32.totalorder %s31, 0
      %p204 = por %p202, %p203
      %p205 = scmp.ne.s32.totalorder %s191, %s192
      %p206 = scmp.eq.s32.totalorder %s32, 1
      %p207 = por %p205, %p206
      %p209 = scmp.ne.s32.totalorder %s192, %s208
      %p210 = scmp.eq.s32.totalorder %s32, 0
      %p211 = por %p209, %p210
      %s212 = ssub.s32 %s26, %s33
      %p213 = scmp.eq.s32.totalorder %s212, 0
      %s215 = sadd.s32 %s214, 1
      %s216 = scalar_select %p213, %s214, %s215
      %p219 = pneg %p213
      %p220 = scmp.eq.s32.totalorder %s26, 1
      %p221 = por %p219, %p220
      %p222 = scmp.ne.s32.totalorder %s214, %s217
      %p223 = scmp.eq.s32.totalorder %s26, 0
      %p224 = por %p222, %p223
      %p225 = scmp.ne.s32.totalorder %s214, %s217
      %p226 = scmp.eq.s32.totalorder %s31, 1
      %p227 = por %p225, %p226
      %p228 = scmp.ne.s32.totalorder %s217, %s218
      %p229 = scmp.eq.s32.totalorder %s31, 0
      %p230 = por %p228, %p229
      %p231 = scmp.ne.s32.totalorder %s217, %s218
      %p232 = scmp.eq.s32.totalorder %s32, 1
      %p233 = por %p231, %p232
      %p235 = scmp.ne.s32.totalorder %s218, %s234
      %p236 = scmp.eq.s32.totalorder %s32, 0
      %p237 = por %p235, %p236
      %p238 = scmp.le.s32.totalorder 1, %s26
      %p239 = scmp.lt.s32.totalorder %s26, 3
      %p240 = pnand %p238, %p239
      %p241 = pneg %p240
      // Predicated region
      $region9: #{tpu_custom_call.1} parent=5 // pred_check
        _
      $region10: #{tpu_custom_call.1} parent=5 // pred_check_branch
        %243 = sbr.rel (%p240) target = $region12
      $region11: #{tpu_custom_call.1} parent=5 // pred_region
        %s244 = ssub.s32 %s26, 1
        // Predicated region
        $region13: #{tpu_custom_call.1} parent=11 // pred_check
          %p245 = pneg %p73
        $region14: #{tpu_custom_call.1} parent=11 // pred_check_branch
          %247 = sbr.rel (%p245) target = $region16
        $region15: #{tpu_custom_call.1} parent=11 // pred_region
          %s249 = ssub.s32 1024, 1024
          %250 = vsyncadd [#allocation6], %s249
          %s251 = sshll.u32 [#allocation5], 4
          %s252 = int_to_ptr.vmem [resolvable:$true] %s251
          %257 = dma.hbm_to_vmem [thread:$0]  %s1, 1024, %s252, [#allocation6], 64, 64, 4
        $region16: #{tpu_custom_call.1} parent=11 // pred_fallthru
          _
        // Predicated region
        $region17: #{tpu_custom_call.1} parent=11 // pred_check
          %p258 = pneg %p94
        $region18: #{tpu_custom_call.1} parent=11 // pred_check_branch
          %260 = sbr.rel (%p258) target = $region20
        $region19: #{tpu_custom_call.1} parent=11 // pred_region
          _
        $region20: #{tpu_custom_call.1} parent=11 // pred_fallthru
          _
        // Predicated region
        $region21: #{tpu_custom_call.1} parent=11 // pred_check
          %p261 = pneg %p115
        $region22: #{tpu_custom_call.1} parent=11 // pred_check_branch
          %263 = sbr.rel (%p261) target = $region24
        $region23: #{tpu_custom_call.1} parent=11 // pred_region
          %s265 = ssub.s32 1024, 1024
          %266 = vsyncadd [#allocation6], %s265
          %s267 = sshll.u32 [#allocation7], 4
          %s268 = int_to_ptr.vmem [resolvable:$true] %s267
          %273 = dma.hbm_to_vmem [thread:$0]  %s3, 1024, %s268, [#allocation6], 64, 64, 4
        $region24: #{tpu_custom_call.1} parent=11 // pred_fallthru
          _
        // Predicated region
        $region25: #{tpu_custom_call.1} parent=11 // pred_check
          %p274 = pneg %p136
        $region26: #{tpu_custom_call.1} parent=11 // pred_check_branch
          %276 = sbr.rel (%p274) target = $region28
        $region27: #{tpu_custom_call.1} parent=11 // pred_region
          _
        $region28: #{tpu_custom_call.1} parent=11 // pred_fallthru
          _
        // Predicated region
        $region29: #{tpu_custom_call.1} parent=11 // pred_check
          %p277 = pneg %p157
        $region30: #{tpu_custom_call.1} parent=11 // pred_check_branch
          %279 = sbr.rel (%p277) target = $region32
        $region31: #{tpu_custom_call.1} parent=11 // pred_region
          %s281 = ssub.s32 1024, 1024
          %282 = vsyncadd [#allocation9], %s281
          %s283 = sshll.u32 [#allocation8], 4
          %s284 = int_to_ptr.vmem [resolvable:$true] %s283
          %289 = dma.hbm_to_vmem [thread:$0]  %s5, 1024, %s284, [#allocation9], 64, 64, 4
        $region32: #{tpu_custom_call.1} parent=11 // pred_fallthru
          _
        // Predicated region
        $region33: #{tpu_custom_call.1} parent=11 // pred_check
          %p290 = pneg %p178
        $region34: #{tpu_custom_call.1} parent=11 // pred_check_branch
          %292 = sbr.rel (%p290) target = $region36
        $region35: #{tpu_custom_call.1} parent=11 // pred_region
          _
        $region36: #{tpu_custom_call.1} parent=11 // pred_fallthru
          _
      $region12: #{tpu_custom_call.1} parent=5 // pred_fallthru
        _
      %p293 = scmp.lt.s32.totalorder %s26, 2
      // Predicated region
      $region37: #{tpu_custom_call.1} parent=5 // pred_check
        %p294 = pneg %p293
      $region38: #{tpu_custom_call.1} parent=5 // pred_check_branch
        %296 = sbr.rel (%p294) target = $region40
      $region39: #{tpu_custom_call.1} parent=5 // pred_region
        // Predicated region
        $region41: #{tpu_custom_call.1} parent=39 // pred_check
          %p297 = pneg %p46
        $region42: #{tpu_custom_call.1} parent=39 // pred_check_branch
          %299 = sbr.rel (%p297) target = $region44
        $region43: #{tpu_custom_call.1} parent=39 // pred_region
          %s300 = sand.u32 %s36, 1
          %s301 = scalar_lea.sflag [#allocation3], %s300
          %s302 = sand.u32 %s36, 1
          %s303 = smul.addr %s302, 8
          %s304 = scalar_lea.vmem [#allocation2], %s303
          %s305 = smul.u32 2, %s26
          %s307 = ssub.s32 128, 128
          %308 = vsyncadd %s301, %s307
          %s309 = smul.addr %s305, 64
          %s310 = scalar_lea.hbm %s0, %s309
          %s311 = sshll.u32 %s304, 4
          %s312 = int_to_ptr.vmem [resolvable:$true] %s311
          %317 = dma.hbm_to_vmem [thread:$0]  %s310, 128, %s312, %s301, 64, 64, 4
        $region44: #{tpu_custom_call.1} parent=39 // pred_fallthru
          _
      $region40: #{tpu_custom_call.1} parent=5 // pred_fallthru
        _
      %p318 = scmp.le.s32.totalorder 1, %s26
      %p319 = scmp.lt.s32.totalorder %s26, 3
      %p320 = pnand %p318, %p319
      %p321 = pneg %p320
      // Predicated region
      $region45: #{tpu_custom_call.1} parent=5 // pred_check
        _
      $region46: #{tpu_custom_call.1} parent=5 // pred_check_branch
        %323 = sbr.rel (%p320) target = $region48
      $region47: #{tpu_custom_call.1} parent=5 // pred_region
        %s324 = ssub.s32 %s26, 1
        %s325 = sand.u32 %s39, 1
        %s326 = scalar_lea.sflag [#allocation3], %s325
        %s327 = sand.u32 %s39, 1
        %s328 = smul.addr %s327, 8
        %s329 = scalar_lea.vmem [#allocation2], %s328
        // Predicated region
        $region49: #{tpu_custom_call.1} parent=47 // pred_check
          %p330 = pneg %p52
        $region50: #{tpu_custom_call.1} parent=47 // pred_check_branch
          %332 = sbr.rel (%p330) target = $region52
        $region51: #{tpu_custom_call.1} parent=47 // pred_region
          %333 = dma.done %s326, 128
        $region52: #{tpu_custom_call.1} parent=47 // pred_fallthru
          _
        // Predicated region
        $region53: #{tpu_custom_call.1} parent=47 // pred_check
          %p334 = pneg %p73
        $region54: #{tpu_custom_call.1} parent=47 // pred_check_branch
          %336 = sbr.rel (%p334) target = $region56
        $region55: #{tpu_custom_call.1} parent=47 // pred_region
          %337 = dma.done [#allocation6], 1024
        $region56: #{tpu_custom_call.1} parent=47 // pred_fallthru
          _
        // Predicated region
        $region57: #{tpu_custom_call.1} parent=47 // pred_check
          %p338 = pneg %p115
        $region58: #{tpu_custom_call.1} parent=47 // pred_check_branch
          %340 = sbr.rel (%p338) target = $region60
        $region59: #{tpu_custom_call.1} parent=47 // pred_region
          %341 = dma.done [#allocation6], 1024
        $region60: #{tpu_custom_call.1} parent=47 // pred_fallthru
          _
        // Predicated region
        $region61: #{tpu_custom_call.1} parent=47 // pred_check
          %p342 = pneg %p157
        $region62: #{tpu_custom_call.1} parent=47 // pred_check_branch
          %344 = sbr.rel (%p342) target = $region64
        $region63: #{tpu_custom_call.1} parent=47 // pred_region
          %345 = dma.done [#allocation9], 1024
        $region64: #{tpu_custom_call.1} parent=47 // pred_fallthru
          _
        %s346 = sand.u32 %s39, 1
        %s347 = scalar_lea.sflag [#allocation3], %s346
        %s348 = sand.u32 %s39, 1
        %s349 = smul.addr %s348, 8
        %s350 = scalar_lea.vmem [#allocation2], %s349
        %p351 = pneg %p52
        %p352 = pneg %p49
        %p353 = pneg %p73
        %p354 = pneg %p70
        %p355 = pneg %p94
        %p356 = pneg %p91
        %p357 = pneg %p115
        %p358 = pneg %p112
        %p359 = pneg %p136
        %p360 = pneg %p133
        %p361 = pneg %p157
        %p362 = pneg %p154
        %p363 = pneg %p178
        %p364 = pneg %p175
        %p365 = pneg %p204
        %p366 = pneg %p201
        %s367 = sand.u32 %s191, 1
        %s368 = scalar_lea.sflag [#allocation4], %s367
        %s369 = sand.u32 %s191, 1
        %s370 = smul.addr %s369, 16
        %s371 = scalar_lea.vmem [#allocation10], %s370
        %p372 = pneg %p230
        %p373 = pneg %p227
        %s374 = sand.u32 %s217, 1
        %s375 = scalar_lea.sflag [#allocation12], %s374
        %s376 = sand.u32 %s217, 1
        %s377 = smul.addr %s376, 16
        %s378 = scalar_lea.vmem [#allocation11], %s377
        %s379 = smul.u32 2, %s31
        %s380 = smul.u32 2, %s31
        %s381 = smul.u32 2, %s31
        %v383 = vld [vmem:[%s329] sm:$0xf]
        %v384 = vld [vmem:[%s329 + $0x4] sm:$0xf]
        %v385 = vld [vmem:[#allocation5] sm:$0xf]
        %v386 = vld [vmem:[#allocation5 + $0x4] sm:$0xf]
        %v387 = vld [vmem:[#allocation5 + $0x8] sm:$0xf]
        %v388 = vld [vmem:[#allocation5 + $0xc] sm:$0xf]
        %v389 = vld [vmem:[#allocation5 + $0x10] sm:$0xf]
        %v390 = vld [vmem:[#allocation5 + $0x14] sm:$0xf]
        %v391 = vld [vmem:[#allocation5 + $0x18] sm:$0xf]
        %v392 = vld [vmem:[#allocation5 + $0x1c] sm:$0xf]
        %v393 = vld [vmem:[#allocation5 + $0x20] sm:$0xf]
        %v394 = vld [vmem:[#allocation5 + $0x24] sm:$0xf]
        %v395 = vld [vmem:[#allocation5 + $0x28] sm:$0xf]
        %v396 = vld [vmem:[#allocation5 + $0x2c] sm:$0xf]
        %v397 = vld [vmem:[#allocation5 + $0x30] sm:$0xf]
        %v398 = vld [vmem:[#allocation5 + $0x34] sm:$0xf]
        %v399 = vld [vmem:[#allocation5 + $0x38] sm:$0xf]
        %v400 = vld [vmem:[#allocation5 + $0x3c] sm:$0xf]
        %v401 = vld [vmem:[%s2] sm:$0x1]
        %v403 = vlaneseq
        %v404 = vshrl.u32 %v403, 7
        %v405 = vsub.s32 0, %v404
        %v406 = vrot.slane %v401, %v405
        %v410 = vunpack.c.l.b16 %v383
        %v411 = vunpack.c.l.b16 %v384
        %v412 = vpack.c.b16 %v411, %v410
        %v430 = vunpack.c.l.b16 %v385
        %v431 = vunpack.c.l.b16 %v386
        %v432 = vunpack.c.l.b16 %v387
        %v433 = vunpack.c.l.b16 %v388
        %v434 = vunpack.c.l.b16 %v389
        %v435 = vunpack.c.l.b16 %v390
        %v436 = vunpack.c.l.b16 %v391
        %v437 = vunpack.c.l.b16 %v392
        %v438 = vunpack.c.l.b16 %v393
        %v439 = vunpack.c.l.b16 %v394
        %v440 = vunpack.c.l.b16 %v395
        %v441 = vunpack.c.l.b16 %v396
        %v442 = vunpack.c.l.b16 %v397
        %v443 = vunpack.c.l.b16 %v398
        %v444 = vunpack.c.l.b16 %v399
        %v445 = vunpack.c.l.b16 %v400
        %v446 = vpack.c.b16 %v431, %v430
        %v447 = vpack.c.b16 %v433, %v432
        %v448 = vpack.c.b16 %v435, %v434
        %v449 = vpack.c.b16 %v437, %v436
        %v450 = vpack.c.b16 %v439, %v438
        %v451 = vpack.c.b16 %v441, %v440
        %v452 = vpack.c.b16 %v443, %v442
        %v453 = vpack.c.b16 %v445, %v444
        %462 = vmatprep.subr.bf16.mxu0 0
        %463 = vmatpush1.bf16.msra.mxu0 %v446
        %464 = vmatprep.subr.bf16.mxu0 0
        %465 = vmatpush1.bf16.msra.mxu0 %v447
        %466 = vmatprep.subr.bf16.mxu0 0
        %467 = vmatpush1.bf16.msra.mxu0 %v448
        %468 = vmatprep.subr.bf16.mxu0 0
        %469 = vmatpush1.bf16.msra.mxu0 %v449
        %470 = vmatprep.subr.bf16.mxu0 0
        %471 = vmatpush1.bf16.msra.mxu0 %v450
        %472 = vmatprep.subr.bf16.mxu0 0
        %473 = vmatpush1.bf16.msra.mxu0 %v451
        %474 = vmatprep.subr.bf16.mxu0 0
        %475 = vmatpush1.bf16.msra.mxu0 %v452
        %476 = vmatprep.subr.bf16.mxu0 0
        %477 = vmatpush1.bf16.msra.mxu0 %v453
        %478 = vmatprep.subr.bf16.mxu0 0
        %479 = vmatpush1.bf16.msra.mxu0 0
        %480 = vmatprep.subr.bf16.mxu0 0
        %481 = vmatpush1.bf16.msra.mxu0 0
        %482 = vmatprep.subr.bf16.mxu0 0
        %483 = vmatpush1.bf16.msra.mxu0 0
        %484 = vmatprep.subr.bf16.mxu0 0
        %485 = vmatpush1.bf16.msra.mxu0 0
        %486 = vmatprep.subr.bf16.mxu0 0
        %487 = vmatpush1.bf16.msra.mxu0 0
        %488 = vmatprep.subr.bf16.mxu0 0
        %489 = vmatpush1.bf16.msra.mxu0 0
        %490 = vmatprep.subr.bf16.mxu0 0
        %491 = vmatpush1.bf16.msra.mxu0 0
        %492 = vmatprep.subr.bf16.mxu0 0
        %493 = vmatpush1.bf16.msra.mxu0 0
        %494 = vmatprep.mubr.bf16.mxu0 0
        %495 = vmatmul.mubr.bf16.gmra.mrb[0].mxu0 %v412
        %v496 = vpop.f32.mrb[0].mxu0
        %v497 = vadd.f32 %v406, %v496
        %v498 = vpop.f32.mrb[0].mxu0
        %v499 = vpop.f32.mrb[0].mxu0
        %v500 = vadd.f32 %v406, %v499
        %v501 = vpop.f32.mrb[0].mxu0
        %502 = vdwg.mxu0
        %503 = vst [vmem:[%s371] sm:$0xff] %v497
        %504 = vst [vmem:[%s371 + $0x8] sm:$0xff] %v500
        %v505 = vld [vmem:[#allocation7] sm:$0xf]
        %v506 = vld [vmem:[#allocation7 + $0x4] sm:$0xf]
        %v507 = vld [vmem:[#allocation7 + $0x8] sm:$0xf]
        %v508 = vld [vmem:[#allocation7 + $0xc] sm:$0xf]
        %v509 = vld [vmem:[#allocation7 + $0x10] sm:$0xf]
        %v510 = vld [vmem:[#allocation7 + $0x14] sm:$0xf]
        %v511 = vld [vmem:[#allocation7 + $0x18] sm:$0xf]
        %v512 = vld [vmem:[#allocation7 + $0x1c] sm:$0xf]
        %v513 = vld [vmem:[#allocation7 + $0x20] sm:$0xf]
        %v514 = vld [vmem:[#allocation7 + $0x24] sm:$0xf]
        %v515 = vld [vmem:[#allocation7 + $0x28] sm:$0xf]
        %v516 = vld [vmem:[#allocation7 + $0x2c] sm:$0xf]
        %v517 = vld [vmem:[#allocation7 + $0x30] sm:$0xf]
        %v518 = vld [vmem:[#allocation7 + $0x34] sm:$0xf]
        %v519 = vld [vmem:[#allocation7 + $0x38] sm:$0xf]
        %v520 = vld [vmem:[#allocation7 + $0x3c] sm:$0xf]
        %v521 = vld [vmem:[%s4] sm:$0x1]
        %v523 = vlaneseq
        %v524 = vshrl.u32 %v523, 7
        %v525 = vsub.s32 0, %v524
        %v526 = vrot.slane %v521, %v525
        %v544 = vunpack.c.l.b16 %v505
        %v545 = vunpack.c.l.b16 %v506
        %v546 = vunpack.c.l.b16 %v507
        %v547 = vunpack.c.l.b16 %v508
        %v548 = vunpack.c.l.b16 %v509
        %v549 = vunpack.c.l.b16 %v510
        %v550 = vunpack.c.l.b16 %v511
        %v551 = vunpack.c.l.b16 %v512
        %v552 = vunpack.c.l.b16 %v513
        %v553 = vunpack.c.l.b16 %v514
        %v554 = vunpack.c.l.b16 %v515
        %v555 = vunpack.c.l.b16 %v516
        %v556 = vunpack.c.l.b16 %v517
        %v557 = vunpack.c.l.b16 %v518
        %v558 = vunpack.c.l.b16 %v519
        %v559 = vunpack.c.l.b16 %v520
        %v560 = vpack.c.b16 %v545, %v544
        %v561 = vpack.c.b16 %v547, %v546
        %v562 = vpack.c.b16 %v549, %v548
        %v563 = vpack.c.b16 %v551, %v550
        %v564 = vpack.c.b16 %v553, %v552
        %v565 = vpack.c.b16 %v555, %v554
        %v566 = vpack.c.b16 %v557, %v556
        %v567 = vpack.c.b16 %v559, %v558
        %576 = vmatprep.subr.bf16.mxu0 0
        %577 = vmatpush1.bf16.msra.mxu0 %v560
        %578 = vmatprep.subr.bf16.mxu0 0
        %579 = vmatpush1.bf16.msra.mxu0 %v561
        %580 = vmatprep.subr.bf16.mxu0 0
        %581 = vmatpush1.bf16.msra.mxu0 %v562
        %582 = vmatprep.subr.bf16.mxu0 0
        %583 = vmatpush1.bf16.msra.mxu0 %v563
        %584 = vmatprep.subr.bf16.mxu0 0
        %585 = vmatpush1.bf16.msra.mxu0 %v564
        %586 = vmatprep.subr.bf16.mxu0 0
        %587 = vmatpush1.bf16.msra.mxu0 %v565
        %588 = vmatprep.subr.bf16.mxu0 0
        %589 = vmatpush1.bf16.msra.mxu0 %v566
        %590 = vmatprep.subr.bf16.mxu0 0
        %591 = vmatpush1.bf16.msra.mxu0 %v567
        %592 = vmatprep.subr.bf16.mxu0 0
        %593 = vmatpush1.bf16.msra.mxu0 0
        %594 = vmatprep.subr.bf16.mxu0 0
        %595 = vmatpush1.bf16.msra.mxu0 0
        %596 = vmatprep.subr.bf16.mxu0 0
        %597 = vmatpush1.bf16.msra.mxu0 0
        %598 = vmatprep.subr.bf16.mxu0 0
        %599 = vmatpush1.bf16.msra.mxu0 0
        %600 = vmatprep.subr.bf16.mxu0 0
        %601 = vmatpush1.bf16.msra.mxu0 0
        %602 = vmatprep.subr.bf16.mxu0 0
        %603 = vmatpush1.bf16.msra.mxu0 0
        %604 = vmatprep.subr.bf16.mxu0 0
        %605 = vmatpush1.bf16.msra.mxu0 0
        %606 = vmatprep.subr.bf16.mxu0 0
        %607 = vmatpush1.bf16.msra.mxu0 0
        %608 = vmatprep.mubr.bf16.mxu0 0
        %609 = vmatmul.mubr.bf16.gmra.mrb[0].mxu0 %v412
        %v610 = vpop.f32.mrb[0].mxu0
        %v611 = vadd.f32 %v526, %v610
        %v612 = vpop.f32.mrb[0].mxu0
        %v613 = vpop.f32.mrb[0].mxu0
        %v614 = vadd.f32 %v526, %v613
        %v615 = vpop.f32.mrb[0].mxu0
        %616 = vdwg.mxu0
        %v617 = vmax.f32 %v611, 0.0
        %v618 = vmax.f32 %v614, 0.0
        %v619 = vpack.c.bf16 %v618, %v617
        %v620 = vld [vmem:[#allocation8] sm:$0xf]
        %v621 = vld [vmem:[#allocation8 + $0x4] sm:$0xf]
        %v622 = vld [vmem:[#allocation8 + $0x8] sm:$0xf]
        %v623 = vld [vmem:[#allocation8 + $0xc] sm:$0xf]
        %v624 = vld [vmem:[#allocation8 + $0x10] sm:$0xf]
        %v625 = vld [vmem:[#allocation8 + $0x14] sm:$0xf]
        %v626 = vld [vmem:[#allocation8 + $0x18] sm:$0xf]
        %v627 = vld [vmem:[#allocation8 + $0x1c] sm:$0xf]
        %v628 = vld [vmem:[#allocation8 + $0x20] sm:$0xf]
        %v629 = vld [vmem:[#allocation8 + $0x24] sm:$0xf]
        %v630 = vld [vmem:[#allocation8 + $0x28] sm:$0xf]
        %v631 = vld [vmem:[#allocation8 + $0x2c] sm:$0xf]
        %v632 = vld [vmem:[#allocation8 + $0x30] sm:$0xf]
        %v633 = vld [vmem:[#allocation8 + $0x34] sm:$0xf]
        %v634 = vld [vmem:[#allocation8 + $0x38] sm:$0xf]
        %v635 = vld [vmem:[#allocation8 + $0x3c] sm:$0xf]
        %v636 = vld [vmem:[%s6] sm:$0x1]
        %v638 = vlaneseq
        %v639 = vshrl.u32 %v638, 7
        %v640 = vsub.s32 0, %v639
        %v641 = vrot.slane %v636, %v640
        %v659 = vunpack.c.l.b16 %v620
        %v660 = vunpack.c.l.b16 %v621
        %v661 = vunpack.c.l.b16 %v622
        %v662 = vunpack.c.l.b16 %v623
        %v663 = vunpack.c.l.b16 %v624
        %v664 = vunpack.c.l.b16 %v625
        %v665 = vunpack.c.l.b16 %v626
        %v666 = vunpack.c.l.b16 %v627
        %v667 = vunpack.c.l.b16 %v628
        %v668 = vunpack.c.l.b16 %v629
        %v669 = vunpack.c.l.b16 %v630
        %v670 = vunpack.c.l.b16 %v631
        %v671 = vunpack.c.l.b16 %v632
        %v672 = vunpack.c.l.b16 %v633
        %v673 = vunpack.c.l.b16 %v634
        %v674 = vunpack.c.l.b16 %v635
        %v675 = vpack.c.b16 %v660, %v659
        %v676 = vpack.c.b16 %v662, %v661
        %v677 = vpack.c.b16 %v664, %v663
        %v678 = vpack.c.b16 %v666, %v665
        %v679 = vpack.c.b16 %v668, %v667
        %v680 = vpack.c.b16 %v670, %v669
        %v681 = vpack.c.b16 %v672, %v671
        %v682 = vpack.c.b16 %v674, %v673
        %691 = vmatprep.subr.bf16.mxu0 0
        %692 = vmatpush1.bf16.msra.mxu0 %v675
        %693 = vmatprep.subr.bf16.mxu0 0
        %694 = vmatpush1.bf16.msra.mxu0 %v676
        %695 = vmatprep.subr.bf16.mxu0 0
        %696 = vmatpush1.bf16.msra.mxu0 %v677
        %697 = vmatprep.subr.bf16.mxu0 0
        %698 = vmatpush1.bf16.msra.mxu0 %v678
        %699 = vmatprep.subr.bf16.mxu0 0
        %700 = vmatpush1.bf16.msra.mxu0 %v679
        %701 = vmatprep.subr.bf16.mxu0 0
        %702 = vmatpush1.bf16.msra.mxu0 %v680
        %703 = vmatprep.subr.bf16.mxu0 0
        %704 = vmatpush1.bf16.msra.mxu0 %v681
        %705 = vmatprep.subr.bf16.mxu0 0
        %706 = vmatpush1.bf16.msra.mxu0 %v682
        %707 = vmatprep.subr.bf16.mxu0 0
        %708 = vmatpush1.bf16.msra.mxu0 0
        %709 = vmatprep.subr.bf16.mxu0 0
        %710 = vmatpush1.bf16.msra.mxu0 0
        %711 = vmatprep.subr.bf16.mxu0 0
        %712 = vmatpush1.bf16.msra.mxu0 0
        %713 = vmatprep.subr.bf16.mxu0 0
        %714 = vmatpush1.bf16.msra.mxu0 0
        %715 = vmatprep.subr.bf16.mxu0 0
        %716 = vmatpush1.bf16.msra.mxu0 0
        %717 = vmatprep.subr.bf16.mxu0 0
        %718 = vmatpush1.bf16.msra.mxu0 0
        %719 = vmatprep.subr.bf16.mxu0 0
        %720 = vmatpush1.bf16.msra.mxu0 0
        %721 = vmatprep.subr.bf16.mxu0 0
        %722 = vmatpush1.bf16.msra.mxu0 0
        %723 = vmatprep.mubr.bf16.mxu0 0
        %724 = vmatmul.mubr.bf16.gmra.mrb[0].mxu0 %v619
        %v725 = vpop.f32.mrb[0].mxu0
        %v726 = vadd.f32 %v641, %v725
        %v727 = vpop.f32.mrb[0].mxu0
        %v728 = vpop.f32.mrb[0].mxu0
        %v729 = vadd.f32 %v641, %v728
        %v730 = vpop.f32.mrb[0].mxu0
        %731 = vdwg.mxu0
        %732 = vst [vmem:[%s378] sm:$0xff] %v726
        %733 = vst [vmem:[%s378 + $0x8] sm:$0xff] %v729
        %s734 = sand.u32 %s191, 1
        %s735 = scalar_lea.sflag [#allocation4], %s734
        %s736 = sand.u32 %s191, 1
        %s737 = smul.addr %s736, 16
        %s738 = scalar_lea.vmem [#allocation10], %s737
        %s739 = sand.u32 %s217, 1
        %s740 = scalar_lea.sflag [#allocation12], %s739
        %s741 = sand.u32 %s217, 1
        %s742 = smul.addr %s741, 16
        %s743 = scalar_lea.vmem [#allocation11], %s742
        // Predicated region
        $region65: #{tpu_custom_call.1} parent=47 // pred_check
          %p744 = pneg %p201
        $region66: #{tpu_custom_call.1} parent=47 // pred_check_branch
          %746 = sbr.rel (%p744) target = $region68
        $region67: #{tpu_custom_call.1} parent=47 // pred_region
          %s747 = smul.u32 2, %s31
          %s749 = ssub.s32 256, 256
          %750 = vsyncadd %s735, %s749
          %s751 = smul.addr %s747, 128
          %s752 = scalar_lea.hbm %s7, %s751
          %s753 = sshll.u32 %s738, 4
          %s754 = int_to_ptr.vmem [resolvable:$true] %s753
          %759 = dma.vmem_to_hbm [thread:$0]  %s754, 256, %s752, %s735, 128, 128, 8
        $region68: #{tpu_custom_call.1} parent=47 // pred_fallthru
          _
        // Predicated region
        $region69: #{tpu_custom_call.1} parent=47 // pred_check
          %p760 = pneg %p227
        $region70: #{tpu_custom_call.1} parent=47 // pred_check_branch
          %762 = sbr.rel (%p760) target = $region72
        $region71: #{tpu_custom_call.1} parent=47 // pred_region
          %s763 = smul.u32 2, %s31
          %s765 = ssub.s32 256, 256
          %766 = vsyncadd %s740, %s765
          %s767 = smul.addr %s763, 128
          %s768 = scalar_lea.hbm %s8, %s767
          %s769 = sshll.u32 %s743, 4
          %s770 = int_to_ptr.vmem [resolvable:$true] %s769
          %775 = dma.vmem_to_hbm [thread:$0]  %s770, 256, %s768, %s740, 128, 128, 8
        $region72: #{tpu_custom_call.1} parent=47 // pred_fallthru
          _
      $region48: #{tpu_custom_call.1} parent=5 // pred_fallthru
        _
      %p776 = scmp.le.s32.totalorder 2, %s26
      // Predicated region
      $region73: #{tpu_custom_call.1} parent=5 // pred_check
        %p777 = pneg %p776
      $region74: #{tpu_custom_call.1} parent=5 // pred_check_branch
        %779 = sbr.rel (%p777) target = $region76
      $region75: #{tpu_custom_call.1} parent=5 // pred_region
        %s780 = ssub.s32 %s26, 2
        // Predicated region
        $region77: #{tpu_custom_call.1} parent=75 // pred_check
          %p781 = pneg %p207
        $region78: #{tpu_custom_call.1} parent=75 // pred_check_branch
          %783 = sbr.rel (%p781) target = $region80
        $region79: #{tpu_custom_call.1} parent=75 // pred_region
          %s784 = sand.u32 %s192, 1
          %s785 = scalar_lea.sflag [#allocation4], %s784
          %s786 = sand.u32 %s192, 1
          %s787 = smul.addr %s786, 16
          %s788 = scalar_lea.vmem [#allocation10], %s787
          %789 = dma.done %s785, 256
        $region80: #{tpu_custom_call.1} parent=75 // pred_fallthru
          _
        // Predicated region
        $region81: #{tpu_custom_call.1} parent=75 // pred_check
          %p790 = pneg %p233
        $region82: #{tpu_custom_call.1} parent=75 // pred_check_branch
          %792 = sbr.rel (%p790) target = $region84
        $region83: #{tpu_custom_call.1} parent=75 // pred_region
          %s793 = sand.u32 %s218, 1
          %s794 = scalar_lea.sflag [#allocation12], %s793
          %s795 = sand.u32 %s218, 1
          %s796 = smul.addr %s795, 16
          %s797 = scalar_lea.vmem [#allocation11], %s796
          %798 = dma.done %s794, 256
        $region84: #{tpu_custom_call.1} parent=75 // pred_fallthru
          _
      $region76: #{tpu_custom_call.1} parent=5 // pred_fallthru
        _
    $region6: #{tpu_custom_call.1} parent=1 // loop_footer
      %s30 = sadd.s32 1, %s26
    $region7: #{tpu_custom_call.1} parent=1 // loop_footer_branch
      %25 = sbr.rel target = $region3
    $region8: #{tpu_custom_call.1} parent=1 // loop_exit
      _
    %799 = vsyncpa [#allocation3], 1
    %s800 = scalar_lea.sflag [#allocation3], 1
    %801 = vsyncpa %s800, 1
    %802 = vsyncpa [#allocation6], 1
    %803 = vsyncpa [#allocation9], 1
    %804 = vsyncpa [#allocation4], 1
    %s805 = scalar_lea.sflag [#allocation4], 1
    %806 = vsyncpa %s805, 1
    %807 = vsyncpa [#allocation12], 1
    %s808 = scalar_lea.sflag [#allocation12], 1
    %809 = vsyncpa %s808, 1

</llo_original>
